<compile_context>
chip_gen: v7x
topology: tpu7x:2x2x1
jax: 0.10.0
libtpu: 0.0.40
codegen_flags: <defaults>
</compile_context>

<pallas_src>
import functools
import math

import jax
import jax.numpy as jnp
from jax.experimental import pallas as pl
from jax.experimental.pallas import tpu as pltpu  # noqa: F401  (kept for TPU-specific tuning hooks)


# -----------------------------------------------------------------------------
# Fused Pallas kernel
# -----------------------------------------------------------------------------
def fused_lm_kernel(tok_ref, table_ref, *refs, S, B, H, num_layers, has_proj):
    """Full LanguageModel forward in one kernel invocation (no grid).

    Inputs (after tok_ref, table_ref), in order:
      per layer:  wih_t (in_dim, 4H), whh_t (H, 4H), b (1, 4H)
      [proj_wt (H, out_num), proj_b (1, out_num)]   if has_proj
      dec_wt (dec_in, V), dec_b (1, V)
    Outputs:
      decoded (S*B, V), output (S*B, H), h_n (L, B, H), c_n (L, B, H)
    """
    n_lstm = 3 * num_layers
    lstm_refs = refs[:n_lstm]
    idx = n_lstm
    if has_proj:
        proj_wt_ref = refs[idx]
        proj_b_ref = refs[idx + 1]
        idx += 2
    dec_wt_ref = refs[idx]
    dec_b_ref = refs[idx + 1]
    idx += 2
    decoded_ref, out_ref, hN_ref, cN_ref = refs[idx:idx + 4]

    V = table_ref.shape[0]
    N = S * B

    # --- Embedding lookup: one-hot selection on the MXU (keeps the gather
    #     and the (S,B,E) activations inside the kernel / VMEM). ---
    tok = tok_ref[...]                                          # (N, 1) int32
    vocab_ids = jax.lax.broadcasted_iota(jnp.int32, (N, V), 1)  # (N, V)
    onehot = (vocab_ids == tok).astype(jnp.float32)             # (N, V)
    x_all = jnp.dot(onehot, table_ref[...],
                    preferred_element_type=jnp.float32)         # (N, E)
    # self.drop(emb): dropout p = 0.0 -> identity.

    for layer in range(num_layers):
        wih_t = lstm_refs[3 * layer][...]       # (in_dim, 4H)
        whh_t = lstm_refs[3 * layer + 1][...]   # (H, 4H)
        b = lstm_refs[3 * layer + 2][...]       # (1, 4H) = b_ih + b_hh

        # Hoisted input->hidden GEMM for ALL timesteps (off the critical path).
        xg = jnp.dot(x_all, wih_t,
                     preferred_element_type=jnp.float32) + b    # (N, 4H)

        h = jnp.zeros((B, H), jnp.float32)
        c = jnp.zeros((B, H), jnp.float32)

        # Fully-unrolled recurrence: per step only h @ W_hh + gate math.
        for t in range(S):
            g = xg[t * B:(t + 1) * B, :] + jnp.dot(
                h, whh_t, preferred_element_type=jnp.float32)   # (B, 4H)
            # Activate the whole packed gate vreg once, then split.
            sg = jax.nn.sigmoid(g)
            th = jnp.tanh(g)
            i_g = sg[:, 0 * H:1 * H]    # PyTorch gate order: i, f, g, o
            f_g = sg[:, 1 * H:2 * H]
            g_g = th[:, 2 * H:3 * H]
            o_g = sg[:, 3 * H:4 * H]
            c = f_g * c + i_g * g_g
            h = o_g * jnp.tanh(c)
            # Stage this layer's per-step output in the VMEM-resident out buffer.
            out_ref[t * B:(t + 1) * B, :] = h

        hN_ref[layer] = h
        cN_ref[layer] = c
        # Inter-layer dropout p = 0.0 -> identity.
        x_all = out_ref[...]                                    # (N, H)

    # out_ref now holds the last layer's output -> returned as `output`.
    # self.drop(output): identity.
    flat = x_all
    if has_proj:
        flat = jnp.dot(flat, proj_wt_ref[...],
                       preferred_element_type=jnp.float32) + proj_b_ref[...]
    decoded_ref[...] = jnp.dot(flat, dec_wt_ref[...],
                               preferred_element_type=jnp.float32) + dec_b_ref[...]


# -----------------------------------------------------------------------------
# One-time parameter preparation (hoisted transposes / bias fusion)
# -----------------------------------------------------------------------------
def prepare_params(params):
    prepared = {"encoder_weight": params["encoder_weight"]}
    prepared["lstm"] = [{
        "wih_t": jnp.transpose(lw["w_ih"]),                 # (in_dim, 4H)
        "whh_t": jnp.transpose(lw["w_hh"]),                 # (H, 4H)
        "b": (lw["b_ih"] + lw["b_hh"]).reshape(1, -1),      # (1, 4H)
    } for lw in params["lstm"]]
    if "proj_weight" in params:
        prepared["proj_wt"] = jnp.transpose(params["proj_weight"])  # (H, out_num)
        prepared["proj_b"] = params["proj_bias"].reshape(1, -1)
    prepared["dec_wt"] = jnp.transpose(params["decoder_weight"])    # (dec_in, V)
    prepared["dec_b"] = params["decoder_bias"].reshape(1, -1)
    return prepared


# -----------------------------------------------------------------------------
# Forward wrapper (single pallas_call)
# -----------------------------------------------------------------------------
def language_model_forward(tokens, prepared):
    """tokens: (S, B) int32 -> (decoded (S,B,V), output (S,B,H), (h_n, c_n))."""
    S, B = tokens.shape
    V, _E = prepared["encoder_weight"].shape
    H = prepared["lstm"][0]["whh_t"].shape[0]
    L = len(prepared["lstm"])
    has_proj = "proj_wt" in prepared
    N = S * B

    inputs = [tokens.reshape(N, 1).astype(jnp.int32), prepared["encoder_weight"]]
    for lw in prepared["lstm"]:
        inputs += [lw["wih_t"], lw["whh_t"], lw["b"]]
    if has_proj:
        inputs += [prepared["proj_wt"], prepared["proj_b"]]
    inputs += [prepared["dec_wt"], prepared["dec_b"]]

    kernel = functools.partial(fused_lm_kernel, S=S, B=B, H=H,
                               num_layers=L, has_proj=has_proj)
    # Single grid point; every operand is a full-array VMEM block (everything
    # here is well under 100 KiB).
    # TODO(synk): for production vocab sizes the decoder GEMM should get its
    # own tiled grid ((8k-row, 128k-lane tiles), bf16 weights) instead of a
    # full-array block.
    decoded_flat, out_flat, h_n, c_n = pl.pallas_call(
        kernel,
        out_shape=[
            jax.ShapeDtypeStruct((N, V), jnp.float32),
            jax.ShapeDtypeStruct((N, H), jnp.float32),
            jax.ShapeDtypeStruct((L, B, H), jnp.float32),
            jax.ShapeDtypeStruct((L, B, H), jnp.float32),
        ],
    )(*inputs)

    decoded = decoded_flat.reshape(S, B, V)
    output = out_flat.reshape(S, B, H)
    return decoded, output, (h_n, c_n)


# -----------------------------------------------------------------------------
# Deterministic parameter init (matches shapes/ranges of the PyTorch module)
# -----------------------------------------------------------------------------
def init_params(key, model_configs):
    V = model_configs["input_size"]
    E = model_configs["embedding_size"]
    H = model_configs["hidden_size"]
    L = model_configs["num_layers"]
    out_num = model_configs["out_num"]

    keys = iter(jax.random.split(key, 8 + 4 * L))
    params = {}
    # nn.Embedding: uniform(-0.1, 0.1) via init_weights
    params["encoder_weight"] = jax.random.uniform(
        next(keys), (V, E), jnp.float32, -0.1, 0.1)

    # nn.LSTM default init: uniform(-1/sqrt(H), 1/sqrt(H))
    stdv = 1.0 / math.sqrt(H)
    lstm = []
    for layer in range(L):
        in_dim = E if layer == 0 else H
        lstm.append({
            "w_ih": jax.random.uniform(next(keys), (4 * H, in_dim),
                                       jnp.float32, -stdv, stdv),
            "w_hh": jax.random.uniform(next(keys), (4 * H, H),
                                       jnp.float32, -stdv, stdv),
            "b_ih": jax.random.uniform(next(keys), (4 * H,),
                                       jnp.float32, -stdv, stdv),
            "b_hh": jax.random.uniform(next(keys), (4 * H,),
                                       jnp.float32, -stdv, stdv),
        })
    params["lstm"] = lstm

    if out_num is not None:
        stdv_p = math.sqrt(3.0 / (out_num + H))  # self.initialize(proj.weight)
        params["proj_weight"] = jax.random.uniform(
            next(keys), (out_num, H), jnp.float32, -stdv_p, stdv_p)
        params["proj_bias"] = jnp.zeros((out_num,), jnp.float32)
        dec_in = out_num
    else:
        dec_in = H
    # decoder: weight uniform(-0.1, 0.1), bias 0 via init_weights
    params["decoder_weight"] = jax.random.uniform(
        next(keys), (V, dec_in), jnp.float32, -0.1, 0.1)
    params["decoder_bias"] = jnp.zeros((V,), jnp.float32)
    return params


# -----------------------------------------------------------------------------
# Pure-JAX reference (for correctness check)
# -----------------------------------------------------------------------------
def reference_forward(tokens, params, model_configs):
    emb = jnp.take(params["encoder_weight"], tokens, axis=0)
    x = emb
    h_list, c_list = [], []
    for layer in range(model_configs["num_layers"]):
        lw = params["lstm"][layer]
        H = lw["w_hh"].shape[1]
        B = x.shape[1]
        h = jnp.zeros((B, H), jnp.float32)
        c = jnp.zeros((B, H), jnp.float32)
        outs = []
        for t in range(x.shape[0]):
            g = (x[t] @ lw["w_ih"].T + lw["b_ih"]
                 + h @ lw["w_hh"].T + lw["b_hh"])
            i_g = jax.nn.sigmoid(g[:, 0 * H:1 * H])
            f_g = jax.nn.sigmoid(g[:, 1 * H:2 * H])
            g_g = jnp.tanh(g[:, 2 * H:3 * H])
            o_g = jax.nn.sigmoid(g[:, 3 * H:4 * H])
            c = f_g * c + i_g * g_g
            h = o_g * jnp.tanh(c)
            outs.append(h)
        x = jnp.stack(outs, axis=0)
        h_list.append(h)
        c_list.append(c)
    output = x
    S, B, H = output.shape
    flat = output.reshape(S * B, H)
    if model_configs["out_num"] is not None:
        flat = flat @ params["proj_weight"].T + params["proj_bias"]
    dec = flat @ params["decoder_weight"].T + params["decoder_bias"]
    return dec.reshape(S, B, -1), output, (jnp.stack(h_list), jnp.stack(c_list))


# -----------------------------------------------------------------------------
if __name__ == "__main__":
    configs = [
        {   # matches the previous test: 2-layer LSTM, no projection
            "input_size": 64, "embedding_size": 32, "hidden_size": 32,
            "num_layers": 2, "dropout": 0.0, "out_num": None,
        },
        {   # exercises the out_num / proj path
            "input_size": 64, "embedding_size": 32, "hidden_size": 32,
            "num_layers": 1, "dropout": 0.0, "out_num": 48,
        },
    ]
    S, B = 8, 8
    key = jax.random.PRNGKey(0)

    for model_configs in configs:
        k_tok, k_par, key = jax.random.split(key, 3)
        tokens = jax.random.randint(k_tok, (S, B), 0,
                                    model_configs["input_size"], dtype=jnp.int32)
        params = init_params(k_par, model_configs)
        prepared = prepare_params(params)

        decoded, output, (h_n, c_n) = language_model_forward(tokens, prepared)
        jax.block_until_ready((decoded, output, h_n, c_n))

        # sanity check against pure-JAX reference
        ref_dec, ref_out, (ref_h, ref_c) = reference_forward(
            tokens, params, model_configs)
        assert decoded.shape == (S, B, model_configs["input_size"])
        assert output.shape == (S, B, model_configs["hidden_size"])
        assert h_n.shape == (model_configs["num_layers"], B,
                             model_configs["hidden_size"])
        assert c_n.shape == h_n.shape
        assert jnp.allclose(decoded, ref_dec, atol=2e-4, rtol=2e-4)
        assert jnp.allclose(output, ref_out, atol=2e-4, rtol=2e-4)
        assert jnp.allclose(h_n, ref_h, atol=2e-4, rtol=2e-4)
        assert jnp.allclose(c_n, ref_c, atol=2e-4, rtol=2e-4)

    print("KERNEL_OK")
</pallas_src>

<mosaic_0001>
module attributes {stable_mosaic.version = 11 : i64} {
  func.func @fused_lm_kernel(%arg0: memref<64x1xi32, #tpu.memory_space<vmem>>, %arg1: memref<64x32xf32, #tpu.memory_space<vmem>>, %arg2: memref<32x128xf32, #tpu.memory_space<vmem>>, %arg3: memref<32x128xf32, #tpu.memory_space<vmem>>, %arg4: memref<1x128xf32, #tpu.memory_space<vmem>>, %arg5: memref<32x128xf32, #tpu.memory_space<vmem>>, %arg6: memref<32x128xf32, #tpu.memory_space<vmem>>, %arg7: memref<1x128xf32, #tpu.memory_space<vmem>>, %arg8: memref<32x64xf32, #tpu.memory_space<vmem>>, %arg9: memref<1x64xf32, #tpu.memory_space<vmem>>, %arg10: memref<64x64xf32, #tpu.memory_space<vmem>>, %arg11: memref<64x32xf32, #tpu.memory_space<vmem>>, %arg12: memref<2x8x32xf32, #tpu.memory_space<vmem>>, %arg13: memref<2x8x32xf32, #tpu.memory_space<vmem>>) attributes {dimension_semantics = [], scalar_prefetch = 0 : i64, scratch_operands = 0 : i64, tpu.core_type = #tpu.core_type<tc>} {
    %c0 = arith.constant 0 : index
    %c0_0 = arith.constant 0 : index
    %0 = vector.load %arg0[%c0, %c0_0] : memref<64x1xi32, #tpu.memory_space<vmem>>, vector<64x1xi32>
    %1 = tpu.iota {dimensions = array<i32: 1>} : vector<64x64xi32>
    %2 = vector.broadcast %0 : vector<64x1xi32> to vector<64x64xi32>
    %3 = arith.cmpi eq, %1, %2 : vector<64x64xi32>
    %4 = arith.extui %3 : vector<64x64xi1> to vector<64x64xi32>
    %5 = arith.sitofp %4 : vector<64x64xi32> to vector<64x64xf32>
    %c0_1 = arith.constant 0 : index
    %c0_2 = arith.constant 0 : index
    %6 = vector.load %arg1[%c0_1, %c0_2] : memref<64x32xf32, #tpu.memory_space<vmem>>, vector<64x32xf32>
    %cst = arith.constant dense<0.000000e+00> : vector<64x32xf32>
    %7 = tpu.matmul %5, %6, %cst {dimension_numbers = #tpu.dot_dimension_numbers<[1], [0], [0], [1], [0, 0, 1, 1], [], []>} : vector<64x64xf32>, vector<64x32xf32>, vector<64x32xf32> -> vector<64x32xf32>
    %c0_3 = arith.constant 0 : index
    %c0_4 = arith.constant 0 : index
    %8 = vector.load %arg2[%c0_3, %c0_4] : memref<32x128xf32, #tpu.memory_space<vmem>>, vector<32x128xf32>
    %c0_5 = arith.constant 0 : index
    %c0_6 = arith.constant 0 : index
    %9 = vector.load %arg3[%c0_5, %c0_6] : memref<32x128xf32, #tpu.memory_space<vmem>>, vector<32x128xf32>
    %c0_7 = arith.constant 0 : index
    %c0_8 = arith.constant 0 : index
    %10 = vector.load %arg4[%c0_7, %c0_8] : memref<1x128xf32, #tpu.memory_space<vmem>>, vector<1x128xf32>
    %cst_9 = arith.constant dense<0.000000e+00> : vector<64x128xf32>
    %11 = tpu.matmul %7, %8, %cst_9 {dimension_numbers = #tpu.dot_dimension_numbers<[1], [0], [0], [1], [0, 0, 1, 1], [], []>} : vector<64x32xf32>, vector<32x128xf32>, vector<64x128xf32> -> vector<64x128xf32>
    %12 = vector.broadcast %10 : vector<1x128xf32> to vector<64x128xf32>
    %13 = arith.addf %11, %12 : vector<64x128xf32>
    %cst_10 = arith.constant 0.000000e+00 : f32
    %14 = vector.broadcast %cst_10 : f32 to vector<8x32xf32>
    %cst_11 = arith.constant 0.000000e+00 : f32
    %15 = vector.broadcast %cst_11 : f32 to vector<8x32xf32>
    %16 = vector.extract_strided_slice %13 {offsets = [0, 0], sizes = [8, 128], strides = [1, 1]} : vector<64x128xf32> to vector<8x128xf32>
    %cst_12 = arith.constant dense<0.000000e+00> : vector<8x128xf32>
    %17 = tpu.matmul %14, %9, %cst_12 {dimension_numbers = #tpu.dot_dimension_numbers<[1], [0], [0], [1], [0, 0, 1, 1], [], []>} : vector<8x32xf32>, vector<32x128xf32>, vector<8x128xf32> -> vector<8x128xf32>
    %18 = arith.addf %16, %17 : vector<8x128xf32>
    %19 = arith.negf %18 : vector<8x128xf32>
    %20 = math.exp %19 : vector<8x128xf32>
    %cst_13 = arith.constant 1.000000e+00 : f32
    %21 = vector.broadcast %cst_13 : f32 to vector<8x128xf32>
    %22 = arith.addf %21, %20 : vector<8x128xf32>
    %23 = arith.divf %21, %22 : vector<8x128xf32>
    %24 = math.tanh %18 : vector<8x128xf32>
    %25 = vector.extract_strided_slice %23 {offsets = [0, 0], sizes = [8, 32], strides = [1, 1]} : vector<8x128xf32> to vector<8x32xf32>
    %26 = vector.extract_strided_slice %23 {offsets = [0, 32], sizes = [8, 32], strides = [1, 1]} : vector<8x128xf32> to vector<8x32xf32>
    %27 = vector.extract_strided_slice %24 {offsets = [0, 64], sizes = [8, 32], strides = [1, 1]} : vector<8x128xf32> to vector<8x32xf32>
    %28 = vector.extract_strided_slice %23 {offsets = [0, 96], sizes = [8, 32], strides = [1, 1]} : vector<8x128xf32> to vector<8x32xf32>
    %29 = arith.mulf %26, %15 : vector<8x32xf32>
    %30 = arith.mulf %25, %27 : vector<8x32xf32>
    %31 = arith.addf %29, %30 : vector<8x32xf32>
    %32 = math.tanh %31 : vector<8x32xf32>
    %33 = arith.mulf %28, %32 : vector<8x32xf32>
    %c0_14 = arith.constant 0 : index
    %c0_15 = arith.constant 0 : index
    %34 = vector.load %arg11[%c0_14, %c0_15] : memref<64x32xf32, #tpu.memory_space<vmem>>, vector<8x32xf32>
    tpu.vector_store %arg11[%c0_14, %c0_15], %33 {strides = array<i32>} : memref<64x32xf32, #tpu.memory_space<vmem>>, vector<8x32xf32>,
    %35 = vector.extract_strided_slice %13 {offsets = [8, 0], sizes = [8, 128], strides = [1, 1]} : vector<64x128xf32> to vector<8x128xf32>
    %cst_16 = arith.constant dense<0.000000e+00> : vector<8x128xf32>
    %36 = tpu.matmul %33, %9, %cst_16 {dimension_numbers = #tpu.dot_dimension_numbers<[1], [0], [0], [1], [0, 0, 1, 1], [], []>} : vector<8x32xf32>, vector<32x128xf32>, vector<8x128xf32> -> vector<8x128xf32>
    %37 = arith.addf %35, %36 : vector<8x128xf32>
    %38 = arith.negf %37 : vector<8x128xf32>
    %39 = math.exp %38 : vector<8x128xf32>
    %cst_17 = arith.constant 1.000000e+00 : f32
    %40 = vector.broadcast %cst_17 : f32 to vector<8x128xf32>
    %41 = arith.addf %40, %39 : vector<8x128xf32>
    %42 = arith.divf %40, %41 : vector<8x128xf32>
    %43 = math.tanh %37 : vector<8x128xf32>
    %44 = vector.extract_strided_slice %42 {offsets = [0, 0], sizes = [8, 32], strides = [1, 1]} : vector<8x128xf32> to vector<8x32xf32>
    %45 = vector.extract_strided_slice %42 {offsets = [0, 32], sizes = [8, 32], strides = [1, 1]} : vector<8x128xf32> to vector<8x32xf32>
    %46 = vector.extract_strided_slice %43 {offsets = [0, 64], sizes = [8, 32], strides = [1, 1]} : vector<8x128xf32> to vector<8x32xf32>
    %47 = vector.extract_strided_slice %42 {offsets = [0, 96], sizes = [8, 32], strides = [1, 1]} : vector<8x128xf32> to vector<8x32xf32>
    %48 = arith.mulf %45, %31 : vector<8x32xf32>
    %49 = arith.mulf %44, %46 : vector<8x32xf32>
    %50 = arith.addf %48, %49 : vector<8x32xf32>
    %51 = math.tanh %50 : vector<8x32xf32>
    %52 = arith.mulf %47, %51 : vector<8x32xf32>
    %c8 = arith.constant 8 : index
    %c0_18 = arith.constant 0 : index
    %53 = vector.load %arg11[%c8, %c0_18] : memref<64x32xf32, #tpu.memory_space<vmem>>, vector<8x32xf32>
    tpu.vector_store %arg11[%c8, %c0_18], %52 {strides = array<i32>} : memref<64x32xf32, #tpu.memory_space<vmem>>, vector<8x32xf32>,
    %54 = vector.extract_strided_slice %13 {offsets = [16, 0], sizes = [8, 128], strides = [1, 1]} : vector<64x128xf32> to vector<8x128xf32>
    %cst_19 = arith.constant dense<0.000000e+00> : vector<8x128xf32>
    %55 = tpu.matmul %52, %9, %cst_19 {dimension_numbers = #tpu.dot_dimension_numbers<[1], [0], [0], [1], [0, 0, 1, 1], [], []>} : vector<8x32xf32>, vector<32x128xf32>, vector<8x128xf32> -> vector<8x128xf32>
    %56 = arith.addf %54, %55 : vector<8x128xf32>
    %57 = arith.negf %56 : vector<8x128xf32>
    %58 = math.exp %57 : vector<8x128xf32>
    %cst_20 = arith.constant 1.000000e+00 : f32
    %59 = vector.broadcast %cst_20 : f32 to vector<8x128xf32>
    %60 = arith.addf %59, %58 : vector<8x128xf32>
    %61 = arith.divf %59, %60 : vector<8x128xf32>
    %62 = math.tanh %56 : vector<8x128xf32>
    %63 = vector.extract_strided_slice %61 {offsets = [0, 0], sizes = [8, 32], strides = [1, 1]} : vector<8x128xf32> to vector<8x32xf32>
    %64 = vector.extract_strided_slice %61 {offsets = [0, 32], sizes = [8, 32], strides = [1, 1]} : vector<8x128xf32> to vector<8x32xf32>
    %65 = vector.extract_strided_slice %62 {offsets = [0, 64], sizes = [8, 32], strides = [1, 1]} : vector<8x128xf32> to vector<8x32xf32>
    %66 = vector.extract_strided_slice %61 {offsets = [0, 96], sizes = [8, 32], strides = [1, 1]} : vector<8x128xf32> to vector<8x32xf32>
    %67 = arith.mulf %64, %50 : vector<8x32xf32>
    %68 = arith.mulf %63, %65 : vector<8x32xf32>
    %69 = arith.addf %67, %68 : vector<8x32xf32>
    %70 = math.tanh %69 : vector<8x32xf32>
    %71 = arith.mulf %66, %70 : vector<8x32xf32>
    %c16 = arith.constant 16 : index
    %c0_21 = arith.constant 0 : index
    %72 = vector.load %arg11[%c16, %c0_21] : memref<64x32xf32, #tpu.memory_space<vmem>>, vector<8x32xf32>
    tpu.vector_store %arg11[%c16, %c0_21], %71 {strides = array<i32>} : memref<64x32xf32, #tpu.memory_space<vmem>>, vector<8x32xf32>,
    %73 = vector.extract_strided_slice %13 {offsets = [24, 0], sizes = [8, 128], strides = [1, 1]} : vector<64x128xf32> to vector<8x128xf32>
    %cst_22 = arith.constant dense<0.000000e+00> : vector<8x128xf32>
    %74 = tpu.matmul %71, %9, %cst_22 {dimension_numbers = #tpu.dot_dimension_numbers<[1], [0], [0], [1], [0, 0, 1, 1], [], []>} : vector<8x32xf32>, vector<32x128xf32>, vector<8x128xf32> -> vector<8x128xf32>
    %75 = arith.addf %73, %74 : vector<8x128xf32>
    %76 = arith.negf %75 : vector<8x128xf32>
    %77 = math.exp %76 : vector<8x128xf32>
    %cst_23 = arith.constant 1.000000e+00 : f32
    %78 = vector.broadcast %cst_23 : f32 to vector<8x128xf32>
    %79 = arith.addf %78, %77 : vector<8x128xf32>
    %80 = arith.divf %78, %79 : vector<8x128xf32>
    %81 = math.tanh %75 : vector<8x128xf32>
    %82 = vector.extract_strided_slice %80 {offsets = [0, 0], sizes = [8, 32], strides = [1, 1]} : vector<8x128xf32> to vector<8x32xf32>
    %83 = vector.extract_strided_slice %80 {offsets = [0, 32], sizes = [8, 32], strides = [1, 1]} : vector<8x128xf32> to vector<8x32xf32>
    %84 = vector.extract_strided_slice %81 {offsets = [0, 64], sizes = [8, 32], strides = [1, 1]} : vector<8x128xf32> to vector<8x32xf32>
    %85 = vector.extract_strided_slice %80 {offsets = [0, 96], sizes = [8, 32], strides = [1, 1]} : vector<8x128xf32> to vector<8x32xf32>
    %86 = arith.mulf %83, %69 : vector<8x32xf32>
    %87 = arith.mulf %82, %84 : vector<8x32xf32>
    %88 = arith.addf %86, %87 : vector<8x32xf32>
    %89 = math.tanh %88 : vector<8x32xf32>
    %90 = arith.mulf %85, %89 : vector<8x32xf32>
    %c24 = arith.constant 24 : index
    %c0_24 = arith.constant 0 : index
    %91 = vector.load %arg11[%c24, %c0_24] : memref<64x32xf32, #tpu.memory_space<vmem>>, vector<8x32xf32>
    tpu.vector_store %arg11[%c24, %c0_24], %90 {strides = array<i32>} : memref<64x32xf32, #tpu.memory_space<vmem>>, vector<8x32xf32>,
    %92 = vector.extract_strided_slice %13 {offsets = [32, 0], sizes = [8, 128], strides = [1, 1]} : vector<64x128xf32> to vector<8x128xf32>
    %cst_25 = arith.constant dense<0.000000e+00> : vector<8x128xf32>
    %93 = tpu.matmul %90, %9, %cst_25 {dimension_numbers = #tpu.dot_dimension_numbers<[1], [0], [0], [1], [0, 0, 1, 1], [], []>} : vector<8x32xf32>, vector<32x128xf32>, vector<8x128xf32> -> vector<8x128xf32>
    %94 = arith.addf %92, %93 : vector<8x128xf32>
    %95 = arith.negf %94 : vector<8x128xf32>
    %96 = math.exp %95 : vector<8x128xf32>
    %cst_26 = arith.constant 1.000000e+00 : f32
    %97 = vector.broadcast %cst_26 : f32 to vector<8x128xf32>
    %98 = arith.addf %97, %96 : vector<8x128xf32>
    %99 = arith.divf %97, %98 : vector<8x128xf32>
    %100 = math.tanh %94 : vector<8x128xf32>
    %101 = vector.extract_strided_slice %99 {offsets = [0, 0], sizes = [8, 32], strides = [1, 1]} : vector<8x128xf32> to vector<8x32xf32>
    %102 = vector.extract_strided_slice %99 {offsets = [0, 32], sizes = [8, 32], strides = [1, 1]} : vector<8x128xf32> to vector<8x32xf32>
    %103 = vector.extract_strided_slice %100 {offsets = [0, 64], sizes = [8, 32], strides = [1, 1]} : vector<8x128xf32> to vector<8x32xf32>
    %104 = vector.extract_strided_slice %99 {offsets = [0, 96], sizes = [8, 32], strides = [1, 1]} : vector<8x128xf32> to vector<8x32xf32>
    %105 = arith.mulf %102, %88 : vector<8x32xf32>
    %106 = arith.mulf %101, %103 : vector<8x32xf32>
    %107 = arith.addf %105, %106 : vector<8x32xf32>
    %108 = math.tanh %107 : vector<8x32xf32>
    %109 = arith.mulf %104, %108 : vector<8x32xf32>
    %c32 = arith.constant 32 : index
    %c0_27 = arith.constant 0 : index
    %110 = vector.load %arg11[%c32, %c0_27] : memref<64x32xf32, #tpu.memory_space<vmem>>, vector<8x32xf32>
    tpu.vector_store %arg11[%c32, %c0_27], %109 {strides = array<i32>} : memref<64x32xf32, #tpu.memory_space<vmem>>, vector<8x32xf32>,
    %111 = vector.extract_strided_slice %13 {offsets = [40, 0], sizes = [8, 128], strides = [1, 1]} : vector<64x128xf32> to vector<8x128xf32>
    %cst_28 = arith.constant dense<0.000000e+00> : vector<8x128xf32>
    %112 = tpu.matmul %109, %9, %cst_28 {dimension_numbers = #tpu.dot_dimension_numbers<[1], [0], [0], [1], [0, 0, 1, 1], [], []>} : vector<8x32xf32>, vector<32x128xf32>, vector<8x128xf32> -> vector<8x128xf32>
    %113 = arith.addf %111, %112 : vector<8x128xf32>
    %114 = arith.negf %113 : vector<8x128xf32>
    %115 = math.exp %114 : vector<8x128xf32>
    %cst_29 = arith.constant 1.000000e+00 : f32
    %116 = vector.broadcast %cst_29 : f32 to vector<8x128xf32>
    %117 = arith.addf %116, %115 : vector<8x128xf32>
    %118 = arith.divf %116, %117 : vector<8x128xf32>
    %119 = math.tanh %113 : vector<8x128xf32>
    %120 = vector.extract_strided_slice %118 {offsets = [0, 0], sizes = [8, 32], strides = [1, 1]} : vector<8x128xf32> to vector<8x32xf32>
    %121 = vector.extract_strided_slice %118 {offsets = [0, 32], sizes = [8, 32], strides = [1, 1]} : vector<8x128xf32> to vector<8x32xf32>
    %122 = vector.extract_strided_slice %119 {offsets = [0, 64], sizes = [8, 32], strides = [1, 1]} : vector<8x128xf32> to vector<8x32xf32>
    %123 = vector.extract_strided_slice %118 {offsets = [0, 96], sizes = [8, 32], strides = [1, 1]} : vector<8x128xf32> to vector<8x32xf32>
    %124 = arith.mulf %121, %107 : vector<8x32xf32>
    %125 = arith.mulf %120, %122 : vector<8x32xf32>
    %126 = arith.addf %124, %125 : vector<8x32xf32>
    %127 = math.tanh %126 : vector<8x32xf32>
    %128 = arith.mulf %123, %127 : vector<8x32xf32>
    %c40 = arith.constant 40 : index
    %c0_30 = arith.constant 0 : index
    %129 = vector.load %arg11[%c40, %c0_30] : memref<64x32xf32, #tpu.memory_space<vmem>>, vector<8x32xf32>
    tpu.vector_store %arg11[%c40, %c0_30], %128 {strides = array<i32>} : memref<64x32xf32, #tpu.memory_space<vmem>>, vector<8x32xf32>,
    %130 = vector.extract_strided_slice %13 {offsets = [48, 0], sizes = [8, 128], strides = [1, 1]} : vector<64x128xf32> to vector<8x128xf32>
    %cst_31 = arith.constant dense<0.000000e+00> : vector<8x128xf32>
    %131 = tpu.matmul %128, %9, %cst_31 {dimension_numbers = #tpu.dot_dimension_numbers<[1], [0], [0], [1], [0, 0, 1, 1], [], []>} : vector<8x32xf32>, vector<32x128xf32>, vector<8x128xf32> -> vector<8x128xf32>
    %132 = arith.addf %130, %131 : vector<8x128xf32>
    %133 = arith.negf %132 : vector<8x128xf32>
    %134 = math.exp %133 : vector<8x128xf32>
    %cst_32 = arith.constant 1.000000e+00 : f32
    %135 = vector.broadcast %cst_32 : f32 to vector<8x128xf32>
    %136 = arith.addf %135, %134 : vector<8x128xf32>
    %137 = arith.divf %135, %136 : vector<8x128xf32>
    %138 = math.tanh %132 : vector<8x128xf32>
    %139 = vector.extract_strided_slice %137 {offsets = [0, 0], sizes = [8, 32], strides = [1, 1]} : vector<8x128xf32> to vector<8x32xf32>
    %140 = vector.extract_strided_slice %137 {offsets = [0, 32], sizes = [8, 32], strides = [1, 1]} : vector<8x128xf32> to vector<8x32xf32>
    %141 = vector.extract_strided_slice %138 {offsets = [0, 64], sizes = [8, 32], strides = [1, 1]} : vector<8x128xf32> to vector<8x32xf32>
    %142 = vector.extract_strided_slice %137 {offsets = [0, 96], sizes = [8, 32], strides = [1, 1]} : vector<8x128xf32> to vector<8x32xf32>
    %143 = arith.mulf %140, %126 : vector<8x32xf32>
    %144 = arith.mulf %139, %141 : vector<8x32xf32>
    %145 = arith.addf %143, %144 : vector<8x32xf32>
    %146 = math.tanh %145 : vector<8x32xf32>
    %147 = arith.mulf %142, %146 : vector<8x32xf32>
    %c48 = arith.constant 48 : index
    %c0_33 = arith.constant 0 : index
    %148 = vector.load %arg11[%c48, %c0_33] : memref<64x32xf32, #tpu.memory_space<vmem>>, vector<8x32xf32>
    tpu.vector_store %arg11[%c48, %c0_33], %147 {strides = array<i32>} : memref<64x32xf32, #tpu.memory_space<vmem>>, vector<8x32xf32>,
    %149 = vector.extract_strided_slice %13 {offsets = [56, 0], sizes = [8, 128], strides = [1, 1]} : vector<64x128xf32> to vector<8x128xf32>
    %cst_34 = arith.constant dense<0.000000e+00> : vector<8x128xf32>
    %150 = tpu.matmul %147, %9, %cst_34 {dimension_numbers = #tpu.dot_dimension_numbers<[1], [0], [0], [1], [0, 0, 1, 1], [], []>} : vector<8x32xf32>, vector<32x128xf32>, vector<8x128xf32> -> vector<8x128xf32>
    %151 = arith.addf %149, %150 : vector<8x128xf32>
    %152 = arith.negf %151 : vector<8x128xf32>
    %153 = math.exp %152 : vector<8x128xf32>
    %cst_35 = arith.constant 1.000000e+00 : f32
    %154 = vector.broadcast %cst_35 : f32 to vector<8x128xf32>
    %155 = arith.addf %154, %153 : vector<8x128xf32>
    %156 = arith.divf %154, %155 : vector<8x128xf32>
    %157 = math.tanh %151 : vector<8x128xf32>
    %158 = vector.extract_strided_slice %156 {offsets = [0, 0], sizes = [8, 32], strides = [1, 1]} : vector<8x128xf32> to vector<8x32xf32>
    %159 = vector.extract_strided_slice %156 {offsets = [0, 32], sizes = [8, 32], strides = [1, 1]} : vector<8x128xf32> to vector<8x32xf32>
    %160 = vector.extract_strided_slice %157 {offsets = [0, 64], sizes = [8, 32], strides = [1, 1]} : vector<8x128xf32> to vector<8x32xf32>
    %161 = vector.extract_strided_slice %156 {offsets = [0, 96], sizes = [8, 32], strides = [1, 1]} : vector<8x128xf32> to vector<8x32xf32>
    %162 = arith.mulf %159, %145 : vector<8x32xf32>
    %163 = arith.mulf %158, %160 : vector<8x32xf32>
    %164 = arith.addf %162, %163 : vector<8x32xf32>
    %165 = math.tanh %164 : vector<8x32xf32>
    %166 = arith.mulf %161, %165 : vector<8x32xf32>
    %c56 = arith.constant 56 : index
    %c0_36 = arith.constant 0 : index
    %167 = vector.load %arg11[%c56, %c0_36] : memref<64x32xf32, #tpu.memory_space<vmem>>, vector<8x32xf32>
    tpu.vector_store %arg11[%c56, %c0_36], %166 {strides = array<i32>} : memref<64x32xf32, #tpu.memory_space<vmem>>, vector<8x32xf32>,
    %c0_37 = arith.constant 0 : index
    %c0_38 = arith.constant 0 : index
    %c0_39 = arith.constant 0 : index
    %168 = vector.load %arg12[%c0_37, %c0_38, %c0_39] : memref<2x8x32xf32, #tpu.memory_space<vmem>>, vector<1x8x32xf32>
    %169 = vector.shape_cast %168 : vector<1x8x32xf32> to vector<8x32xf32>
    %170 = vector.shape_cast %166 : vector<8x32xf32> to vector<1x8x32xf32>
    tpu.vector_store %arg12[%c0_37, %c0_38, %c0_39], %170 {strides = array<i32>} : memref<2x8x32xf32, #tpu.memory_space<vmem>>, vector<1x8x32xf32>,
    %c0_40 = arith.constant 0 : index
    %c0_41 = arith.constant 0 : index
    %c0_42 = arith.constant 0 : index
    %171 = vector.load %arg13[%c0_40, %c0_41, %c0_42] : memref<2x8x32xf32, #tpu.memory_space<vmem>>, vector<1x8x32xf32>
    %172 = vector.shape_cast %171 : vector<1x8x32xf32> to vector<8x32xf32>
    %173 = vector.shape_cast %164 : vector<8x32xf32> to vector<1x8x32xf32>
    tpu.vector_store %arg13[%c0_40, %c0_41, %c0_42], %173 {strides = array<i32>} : memref<2x8x32xf32, #tpu.memory_space<vmem>>, vector<1x8x32xf32>,
    %c0_43 = arith.constant 0 : index
    %c0_44 = arith.constant 0 : index
    %174 = vector.load %arg11[%c0_43, %c0_44] : memref<64x32xf32, #tpu.memory_space<vmem>>, vector<64x32xf32>
    %c0_45 = arith.constant 0 : index
    %c0_46 = arith.constant 0 : index
    %175 = vector.load %arg5[%c0_45, %c0_46] : memref<32x128xf32, #tpu.memory_space<vmem>>, vector<32x128xf32>
    %c0_47 = arith.constant 0 : index
    %c0_48 = arith.constant 0 : index
    %176 = vector.load %arg6[%c0_47, %c0_48] : memref<32x128xf32, #tpu.memory_space<vmem>>, vector<32x128xf32>
    %c0_49 = arith.constant 0 : index
    %c0_50 = arith.constant 0 : index
    %177 = vector.load %arg7[%c0_49, %c0_50] : memref<1x128xf32, #tpu.memory_space<vmem>>, vector<1x128xf32>
    %cst_51 = arith.constant dense<0.000000e+00> : vector<64x128xf32>
    %178 = tpu.matmul %174, %175, %cst_51 {dimension_numbers = #tpu.dot_dimension_numbers<[1], [0], [0], [1], [0, 0, 1, 1], [], []>} : vector<64x32xf32>, vector<32x128xf32>, vector<64x128xf32> -> vector<64x128xf32>
    %179 = vector.broadcast %177 : vector<1x128xf32> to vector<64x128xf32>
    %180 = arith.addf %178, %179 : vector<64x128xf32>
    %cst_52 = arith.constant 0.000000e+00 : f32
    %181 = vector.broadcast %cst_52 : f32 to vector<8x32xf32>
    %cst_53 = arith.constant 0.000000e+00 : f32
    %182 = vector.broadcast %cst_53 : f32 to vector<8x32xf32>
    %183 = vector.extract_strided_slice %180 {offsets = [0, 0], sizes = [8, 128], strides = [1, 1]} : vector<64x128xf32> to vector<8x128xf32>
    %cst_54 = arith.constant dense<0.000000e+00> : vector<8x128xf32>
    %184 = tpu.matmul %181, %176, %cst_54 {dimension_numbers = #tpu.dot_dimension_numbers<[1], [0], [0], [1], [0, 0, 1, 1], [], []>} : vector<8x32xf32>, vector<32x128xf32>, vector<8x128xf32> -> vector<8x128xf32>
    %185 = arith.addf %183, %184 : vector<8x128xf32>
    %186 = arith.negf %185 : vector<8x128xf32>
    %187 = math.exp %186 : vector<8x128xf32>
    %cst_55 = arith.constant 1.000000e+00 : f32
    %188 = vector.broadcast %cst_55 : f32 to vector<8x128xf32>
    %189 = arith.addf %188, %187 : vector<8x128xf32>
    %190 = arith.divf %188, %189 : vector<8x128xf32>
    %191 = math.tanh %185 : vector<8x128xf32>
    %192 = vector.extract_strided_slice %190 {offsets = [0, 0], sizes = [8, 32], strides = [1, 1]} : vector<8x128xf32> to vector<8x32xf32>
    %193 = vector.extract_strided_slice %190 {offsets = [0, 32], sizes = [8, 32], strides = [1, 1]} : vector<8x128xf32> to vector<8x32xf32>
    %194 = vector.extract_strided_slice %191 {offsets = [0, 64], sizes = [8, 32], strides = [1, 1]} : vector<8x128xf32> to vector<8x32xf32>
    %195 = vector.extract_strided_slice %190 {offsets = [0, 96], sizes = [8, 32], strides = [1, 1]} : vector<8x128xf32> to vector<8x32xf32>
    %196 = arith.mulf %193, %182 : vector<8x32xf32>
    %197 = arith.mulf %192, %194 : vector<8x32xf32>
    %198 = arith.addf %196, %197 : vector<8x32xf32>
    %199 = math.tanh %198 : vector<8x32xf32>
    %200 = arith.mulf %195, %199 : vector<8x32xf32>
    %c0_56 = arith.constant 0 : index
    %c0_57 = arith.constant 0 : index
    %201 = vector.load %arg11[%c0_56, %c0_57] : memref<64x32xf32, #tpu.memory_space<vmem>>, vector<8x32xf32>
    tpu.vector_store %arg11[%c0_56, %c0_57], %200 {strides = array<i32>} : memref<64x32xf32, #tpu.memory_space<vmem>>, vector<8x32xf32>,
    %202 = vector.extract_strided_slice %180 {offsets = [8, 0], sizes = [8, 128], strides = [1, 1]} : vector<64x128xf32> to vector<8x128xf32>
    %cst_58 = arith.constant dense<0.000000e+00> : vector<8x128xf32>
    %203 = tpu.matmul %200, %176, %cst_58 {dimension_numbers = #tpu.dot_dimension_numbers<[1], [0], [0], [1], [0, 0, 1, 1], [], []>} : vector<8x32xf32>, vector<32x128xf32>, vector<8x128xf32> -> vector<8x128xf32>
    %204 = arith.addf %202, %203 : vector<8x128xf32>
    %205 = arith.negf %204 : vector<8x128xf32>
    %206 = math.exp %205 : vector<8x128xf32>
    %cst_59 = arith.constant 1.000000e+00 : f32
    %207 = vector.broadcast %cst_59 : f32 to vector<8x128xf32>
    %208 = arith.addf %207, %206 : vector<8x128xf32>
    %209 = arith.divf %207, %208 : vector<8x128xf32>
    %210 = math.tanh %204 : vector<8x128xf32>
    %211 = vector.extract_strided_slice %209 {offsets = [0, 0], sizes = [8, 32], strides = [1, 1]} : vector<8x128xf32> to vector<8x32xf32>
    %212 = vector.extract_strided_slice %209 {offsets = [0, 32], sizes = [8, 32], strides = [1, 1]} : vector<8x128xf32> to vector<8x32xf32>
    %213 = vector.extract_strided_slice %210 {offsets = [0, 64], sizes = [8, 32], strides = [1, 1]} : vector<8x128xf32> to vector<8x32xf32>
    %214 = vector.extract_strided_slice %209 {offsets = [0, 96], sizes = [8, 32], strides = [1, 1]} : vector<8x128xf32> to vector<8x32xf32>
    %215 = arith.mulf %212, %198 : vector<8x32xf32>
    %216 = arith.mulf %211, %213 : vector<8x32xf32>
    %217 = arith.addf %215, %216 : vector<8x32xf32>
    %218 = math.tanh %217 : vector<8x32xf32>
    %219 = arith.mulf %214, %218 : vector<8x32xf32>
    %c8_60 = arith.constant 8 : index
    %c0_61 = arith.constant 0 : index
    %220 = vector.load %arg11[%c8_60, %c0_61] : memref<64x32xf32, #tpu.memory_space<vmem>>, vector<8x32xf32>
    tpu.vector_store %arg11[%c8_60, %c0_61], %219 {strides = array<i32>} : memref<64x32xf32, #tpu.memory_space<vmem>>, vector<8x32xf32>,
    %221 = vector.extract_strided_slice %180 {offsets = [16, 0], sizes = [8, 128], strides = [1, 1]} : vector<64x128xf32> to vector<8x128xf32>
    %cst_62 = arith.constant dense<0.000000e+00> : vector<8x128xf32>
    %222 = tpu.matmul %219, %176, %cst_62 {dimension_numbers = #tpu.dot_dimension_numbers<[1], [0], [0], [1], [0, 0, 1, 1], [], []>} : vector<8x32xf32>, vector<32x128xf32>, vector<8x128xf32> -> vector<8x128xf32>
    %223 = arith.addf %221, %222 : vector<8x128xf32>
    %224 = arith.negf %223 : vector<8x128xf32>
    %225 = math.exp %224 : vector<8x128xf32>
    %cst_63 = arith.constant 1.000000e+00 : f32
    %226 = vector.broadcast %cst_63 : f32 to vector<8x128xf32>
    %227 = arith.addf %226, %225 : vector<8x128xf32>
    %228 = arith.divf %226, %227 : vector<8x128xf32>
    %229 = math.tanh %223 : vector<8x128xf32>
    %230 = vector.extract_strided_slice %228 {offsets = [0, 0], sizes = [8, 32], strides = [1, 1]} : vector<8x128xf32> to vector<8x32xf32>
    %231 = vector.extract_strided_slice %228 {offsets = [0, 32], sizes = [8, 32], strides = [1, 1]} : vector<8x128xf32> to vector<8x32xf32>
    %232 = vector.extract_strided_slice %229 {offsets = [0, 64], sizes = [8, 32], strides = [1, 1]} : vector<8x128xf32> to vector<8x32xf32>
    %233 = vector.extract_strided_slice %228 {offsets = [0, 96], sizes = [8, 32], strides = [1, 1]} : vector<8x128xf32> to vector<8x32xf32>
    %234 = arith.mulf %231, %217 : vector<8x32xf32>
    %235 = arith.mulf %230, %232 : vector<8x32xf32>
    %236 = arith.addf %234, %235 : vector<8x32xf32>
    %237 = math.tanh %236 : vector<8x32xf32>
    %238 = arith.mulf %233, %237 : vector<8x32xf32>
    %c16_64 = arith.constant 16 : index
    %c0_65 = arith.constant 0 : index
    %239 = vector.load %arg11[%c16_64, %c0_65] : memref<64x32xf32, #tpu.memory_space<vmem>>, vector<8x32xf32>
    tpu.vector_store %arg11[%c16_64, %c0_65], %238 {strides = array<i32>} : memref<64x32xf32, #tpu.memory_space<vmem>>, vector<8x32xf32>,
    %240 = vector.extract_strided_slice %180 {offsets = [24, 0], sizes = [8, 128], strides = [1, 1]} : vector<64x128xf32> to vector<8x128xf32>
    %cst_66 = arith.constant dense<0.000000e+00> : vector<8x128xf32>
    %241 = tpu.matmul %238, %176, %cst_66 {dimension_numbers = #tpu.dot_dimension_numbers<[1], [0], [0], [1], [0, 0, 1, 1], [], []>} : vector<8x32xf32>, vector<32x128xf32>, vector<8x128xf32> -> vector<8x128xf32>
    %242 = arith.addf %240, %241 : vector<8x128xf32>
    %243 = arith.negf %242 : vector<8x128xf32>
    %244 = math.exp %243 : vector<8x128xf32>
    %cst_67 = arith.constant 1.000000e+00 : f32
    %245 = vector.broadcast %cst_67 : f32 to vector<8x128xf32>
    %246 = arith.addf %245, %244 : vector<8x128xf32>
    %247 = arith.divf %245, %246 : vector<8x128xf32>
    %248 = math.tanh %242 : vector<8x128xf32>
    %249 = vector.extract_strided_slice %247 {offsets = [0, 0], sizes = [8, 32], strides = [1, 1]} : vector<8x128xf32> to vector<8x32xf32>
    %250 = vector.extract_strided_slice %247 {offsets = [0, 32], sizes = [8, 32], strides = [1, 1]} : vector<8x128xf32> to vector<8x32xf32>
    %251 = vector.extract_strided_slice %248 {offsets = [0, 64], sizes = [8, 32], strides = [1, 1]} : vector<8x128xf32> to vector<8x32xf32>
    %252 = vector.extract_strided_slice %247 {offsets = [0, 96], sizes = [8, 32], strides = [1, 1]} : vector<8x128xf32> to vector<8x32xf32>
    %253 = arith.mulf %250, %236 : vector<8x32xf32>
    %254 = arith.mulf %249, %251 : vector<8x32xf32>
    %255 = arith.addf %253, %254 : vector<8x32xf32>
    %256 = math.tanh %255 : vector<8x32xf32>
    %257 = arith.mulf %252, %256 : vector<8x32xf32>
    %c24_68 = arith.constant 24 : index
    %c0_69 = arith.constant 0 : index
    %258 = vector.load %arg11[%c24_68, %c0_69] : memref<64x32xf32, #tpu.memory_space<vmem>>, vector<8x32xf32>
    tpu.vector_store %arg11[%c24_68, %c0_69], %257 {strides = array<i32>} : memref<64x32xf32, #tpu.memory_space<vmem>>, vector<8x32xf32>,
    %259 = vector.extract_strided_slice %180 {offsets = [32, 0], sizes = [8, 128], strides = [1, 1]} : vector<64x128xf32> to vector<8x128xf32>
    %cst_70 = arith.constant dense<0.000000e+00> : vector<8x128xf32>
    %260 = tpu.matmul %257, %176, %cst_70 {dimension_numbers = #tpu.dot_dimension_numbers<[1], [0], [0], [1], [0, 0, 1, 1], [], []>} : vector<8x32xf32>, vector<32x128xf32>, vector<8x128xf32> -> vector<8x128xf32>
    %261 = arith.addf %259, %260 : vector<8x128xf32>
    %262 = arith.negf %261 : vector<8x128xf32>
    %263 = math.exp %262 : vector<8x128xf32>
    %cst_71 = arith.constant 1.000000e+00 : f32
    %264 = vector.broadcast %cst_71 : f32 to vector<8x128xf32>
    %265 = arith.addf %264, %263 : vector<8x128xf32>
    %266 = arith.divf %264, %265 : vector<8x128xf32>
    %267 = math.tanh %261 : vector<8x128xf32>
    %268 = vector.extract_strided_slice %266 {offsets = [0, 0], sizes = [8, 32], strides = [1, 1]} : vector<8x128xf32> to vector<8x32xf32>
    %269 = vector.extract_strided_slice %266 {offsets = [0, 32], sizes = [8, 32], strides = [1, 1]} : vector<8x128xf32> to vector<8x32xf32>
    %270 = vector.extract_strided_slice %267 {offsets = [0, 64], sizes = [8, 32], strides = [1, 1]} : vector<8x128xf32> to vector<8x32xf32>
    %271 = vector.extract_strided_slice %266 {offsets = [0, 96], sizes = [8, 32], strides = [1, 1]} : vector<8x128xf32> to vector<8x32xf32>
    %272 = arith.mulf %269, %255 : vector<8x32xf32>
    %273 = arith.mulf %268, %270 : vector<8x32xf32>
    %274 = arith.addf %272, %273 : vector<8x32xf32>
    %275 = math.tanh %274 : vector<8x32xf32>
    %276 = arith.mulf %271, %275 : vector<8x32xf32>
    %c32_72 = arith.constant 32 : index
    %c0_73 = arith.constant 0 : index
    %277 = vector.load %arg11[%c32_72, %c0_73] : memref<64x32xf32, #tpu.memory_space<vmem>>, vector<8x32xf32>
    tpu.vector_store %arg11[%c32_72, %c0_73], %276 {strides = array<i32>} : memref<64x32xf32, #tpu.memory_space<vmem>>, vector<8x32xf32>,
    %278 = vector.extract_strided_slice %180 {offsets = [40, 0], sizes = [8, 128], strides = [1, 1]} : vector<64x128xf32> to vector<8x128xf32>
    %cst_74 = arith.constant dense<0.000000e+00> : vector<8x128xf32>
    %279 = tpu.matmul %276, %176, %cst_74 {dimension_numbers = #tpu.dot_dimension_numbers<[1], [0], [0], [1], [0, 0, 1, 1], [], []>} : vector<8x32xf32>, vector<32x128xf32>, vector<8x128xf32> -> vector<8x128xf32>
    %280 = arith.addf %278, %279 : vector<8x128xf32>
    %281 = arith.negf %280 : vector<8x128xf32>
    %282 = math.exp %281 : vector<8x128xf32>
    %cst_75 = arith.constant 1.000000e+00 : f32
    %283 = vector.broadcast %cst_75 : f32 to vector<8x128xf32>
    %284 = arith.addf %283, %282 : vector<8x128xf32>
    %285 = arith.divf %283, %284 : vector<8x128xf32>
    %286 = math.tanh %280 : vector<8x128xf32>
    %287 = vector.extract_strided_slice %285 {offsets = [0, 0], sizes = [8, 32], strides = [1, 1]} : vector<8x128xf32> to vector<8x32xf32>
    %288 = vector.extract_strided_slice %285 {offsets = [0, 32], sizes = [8, 32], strides = [1, 1]} : vector<8x128xf32> to vector<8x32xf32>
    %289 = vector.extract_strided_slice %286 {offsets = [0, 64], sizes = [8, 32], strides = [1, 1]} : vector<8x128xf32> to vector<8x32xf32>
    %290 = vector.extract_strided_slice %285 {offsets = [0, 96], sizes = [8, 32], strides = [1, 1]} : vector<8x128xf32> to vector<8x32xf32>
    %291 = arith.mulf %288, %274 : vector<8x32xf32>
    %292 = arith.mulf %287, %289 : vector<8x32xf32>
    %293 = arith.addf %291, %292 : vector<8x32xf32>
    %294 = math.tanh %293 : vector<8x32xf32>
    %295 = arith.mulf %290, %294 : vector<8x32xf32>
    %c40_76 = arith.constant 40 : index
    %c0_77 = arith.constant 0 : index
    %296 = vector.load %arg11[%c40_76, %c0_77] : memref<64x32xf32, #tpu.memory_space<vmem>>, vector<8x32xf32>
    tpu.vector_store %arg11[%c40_76, %c0_77], %295 {strides = array<i32>} : memref<64x32xf32, #tpu.memory_space<vmem>>, vector<8x32xf32>,
    %297 = vector.extract_strided_slice %180 {offsets = [48, 0], sizes = [8, 128], strides = [1, 1]} : vector<64x128xf32> to vector<8x128xf32>
    %cst_78 = arith.constant dense<0.000000e+00> : vector<8x128xf32>
    %298 = tpu.matmul %295, %176, %cst_78 {dimension_numbers = #tpu.dot_dimension_numbers<[1], [0], [0], [1], [0, 0, 1, 1], [], []>} : vector<8x32xf32>, vector<32x128xf32>, vector<8x128xf32> -> vector<8x128xf32>
    %299 = arith.addf %297, %298 : vector<8x128xf32>
    %300 = arith.negf %299 : vector<8x128xf32>
    %301 = math.exp %300 : vector<8x128xf32>
    %cst_79 = arith.constant 1.000000e+00 : f32
    %302 = vector.broadcast %cst_79 : f32 to vector<8x128xf32>
    %303 = arith.addf %302, %301 : vector<8x128xf32>
    %304 = arith.divf %302, %303 : vector<8x128xf32>
    %305 = math.tanh %299 : vector<8x128xf32>
    %306 = vector.extract_strided_slice %304 {offsets = [0, 0], sizes = [8, 32], strides = [1, 1]} : vector<8x128xf32> to vector<8x32xf32>
    %307 = vector.extract_strided_slice %304 {offsets = [0, 32], sizes = [8, 32], strides = [1, 1]} : vector<8x128xf32> to vector<8x32xf32>
    %308 = vector.extract_strided_slice %305 {offsets = [0, 64], sizes = [8, 32], strides = [1, 1]} : vector<8x128xf32> to vector<8x32xf32>
    %309 = vector.extract_strided_slice %304 {offsets = [0, 96], sizes = [8, 32], strides = [1, 1]} : vector<8x128xf32> to vector<8x32xf32>
    %310 = arith.mulf %307, %293 : vector<8x32xf32>
    %311 = arith.mulf %306, %308 : vector<8x32xf32>
    %312 = arith.addf %310, %311 : vector<8x32xf32>
    %313 = math.tanh %312 : vector<8x32xf32>
    %314 = arith.mulf %309, %313 : vector<8x32xf32>
    %c48_80 = arith.constant 48 : index
    %c0_81 = arith.constant 0 : index
    %315 = vector.load %arg11[%c48_80, %c0_81] : memref<64x32xf32, #tpu.memory_space<vmem>>, vector<8x32xf32>
    tpu.vector_store %arg11[%c48_80, %c0_81], %314 {strides = array<i32>} : memref<64x32xf32, #tpu.memory_space<vmem>>, vector<8x32xf32>,
    %316 = vector.extract_strided_slice %180 {offsets = [56, 0], sizes = [8, 128], strides = [1, 1]} : vector<64x128xf32> to vector<8x128xf32>
    %cst_82 = arith.constant dense<0.000000e+00> : vector<8x128xf32>
    %317 = tpu.matmul %314, %176, %cst_82 {dimension_numbers = #tpu.dot_dimension_numbers<[1], [0], [0], [1], [0, 0, 1, 1], [], []>} : vector<8x32xf32>, vector<32x128xf32>, vector<8x128xf32> -> vector<8x128xf32>
    %318 = arith.addf %316, %317 : vector<8x128xf32>
    %319 = arith.negf %318 : vector<8x128xf32>
    %320 = math.exp %319 : vector<8x128xf32>
    %cst_83 = arith.constant 1.000000e+00 : f32
    %321 = vector.broadcast %cst_83 : f32 to vector<8x128xf32>
    %322 = arith.addf %321, %320 : vector<8x128xf32>
    %323 = arith.divf %321, %322 : vector<8x128xf32>
    %324 = math.tanh %318 : vector<8x128xf32>
    %325 = vector.extract_strided_slice %323 {offsets = [0, 0], sizes = [8, 32], strides = [1, 1]} : vector<8x128xf32> to vector<8x32xf32>
    %326 = vector.extract_strided_slice %323 {offsets = [0, 32], sizes = [8, 32], strides = [1, 1]} : vector<8x128xf32> to vector<8x32xf32>
    %327 = vector.extract_strided_slice %324 {offsets = [0, 64], sizes = [8, 32], strides = [1, 1]} : vector<8x128xf32> to vector<8x32xf32>
    %328 = vector.extract_strided_slice %323 {offsets = [0, 96], sizes = [8, 32], strides = [1, 1]} : vector<8x128xf32> to vector<8x32xf32>
    %329 = arith.mulf %326, %312 : vector<8x32xf32>
    %330 = arith.mulf %325, %327 : vector<8x32xf32>
    %331 = arith.addf %329, %330 : vector<8x32xf32>
    %332 = math.tanh %331 : vector<8x32xf32>
    %333 = arith.mulf %328, %332 : vector<8x32xf32>
    %c56_84 = arith.constant 56 : index
    %c0_85 = arith.constant 0 : index
    %334 = vector.load %arg11[%c56_84, %c0_85] : memref<64x32xf32, #tpu.memory_space<vmem>>, vector<8x32xf32>
    tpu.vector_store %arg11[%c56_84, %c0_85], %333 {strides = array<i32>} : memref<64x32xf32, #tpu.memory_space<vmem>>, vector<8x32xf32>,
    %c1 = arith.constant 1 : index
    %c0_86 = arith.constant 0 : index
    %c0_87 = arith.constant 0 : index
    %335 = vector.load %arg12[%c1, %c0_86, %c0_87] : memref<2x8x32xf32, #tpu.memory_space<vmem>>, vector<1x8x32xf32>
    %336 = vector.shape_cast %335 : vector<1x8x32xf32> to vector<8x32xf32>
    %337 = vector.shape_cast %333 : vector<8x32xf32> to vector<1x8x32xf32>
    tpu.vector_store %arg12[%c1, %c0_86, %c0_87], %337 {strides = array<i32>} : memref<2x8x32xf32, #tpu.memory_space<vmem>>, vector<1x8x32xf32>,
    %c1_88 = arith.constant 1 : index
    %c0_89 = arith.constant 0 : index
    %c0_90 = arith.constant 0 : index
    %338 = vector.load %arg13[%c1_88, %c0_89, %c0_90] : memref<2x8x32xf32, #tpu.memory_space<vmem>>, vector<1x8x32xf32>
    %339 = vector.shape_cast %338 : vector<1x8x32xf32> to vector<8x32xf32>
    %340 = vector.shape_cast %331 : vector<8x32xf32> to vector<1x8x32xf32>
    tpu.vector_store %arg13[%c1_88, %c0_89, %c0_90], %340 {strides = array<i32>} : memref<2x8x32xf32, #tpu.memory_space<vmem>>, vector<1x8x32xf32>,
    %c0_91 = arith.constant 0 : index
    %c0_92 = arith.constant 0 : index
    %341 = vector.load %arg11[%c0_91, %c0_92] : memref<64x32xf32, #tpu.memory_space<vmem>>, vector<64x32xf32>
    %c0_93 = arith.constant 0 : index
    %c0_94 = arith.constant 0 : index
    %342 = vector.load %arg8[%c0_93, %c0_94] : memref<32x64xf32, #tpu.memory_space<vmem>>, vector<32x64xf32>
    %cst_95 = arith.constant dense<0.000000e+00> : vector<64x64xf32>
    %343 = tpu.matmul %341, %342, %cst_95 {dimension_numbers = #tpu.dot_dimension_numbers<[1], [0], [0], [1], [0, 0, 1, 1], [], []>} : vector<64x32xf32>, vector<32x64xf32>, vector<64x64xf32> -> vector<64x64xf32>
    %c0_96 = arith.constant 0 : index
    %c0_97 = arith.constant 0 : index
    %344 = vector.load %arg9[%c0_96, %c0_97] : memref<1x64xf32, #tpu.memory_space<vmem>>, vector<1x64xf32>
    %345 = vector.broadcast %344 : vector<1x64xf32> to vector<64x64xf32>
    %346 = arith.addf %343, %345 : vector<64x64xf32>
    %c0_98 = arith.constant 0 : index
    %c0_99 = arith.constant 0 : index
    %347 = vector.load %arg10[%c0_98, %c0_99] : memref<64x64xf32, #tpu.memory_space<vmem>>, vector<64x64xf32>
    tpu.vector_store %arg10[%c0_98, %c0_99], %346 {strides = array<i32>} : memref<64x64xf32, #tpu.memory_space<vmem>>, vector<64x64xf32>,
    return
  }
}

</mosaic_0001>

<llo_original>
// kernel: tpu_custom_call.1
$region0: #{tpu_custom_call.1}
  #allocation0 [shape = 'u32[]', space=smem, size = 0x4, offset = 0x4, fixed_abs, tag = 'smem constant byte address 0x4 - core index']
  #allocation1 [shape = 'u32[144,128]{1,0:T(1,128)}', space=vmem, size = 0x12000, scoped, tag = 'internal scratch']
  %s0 = inlined_call_operand.vmem [shape: s32[64,1], index: 0, kind: input, shape index: {}]
  %s1 = inlined_call_operand.vmem [shape: f32[64,32], index: 1, kind: input, shape index: {}]
  %s2 = inlined_call_operand.vmem [shape: f32[32,128], index: 2, kind: input, shape index: {}]
  %s3 = inlined_call_operand.vmem [shape: f32[32,128], index: 3, kind: input, shape index: {}]
  %s4 = inlined_call_operand.vmem [shape: f32[1,128], index: 4, kind: input, shape index: {}]
  %s5 = inlined_call_operand.vmem [shape: f32[32,128], index: 5, kind: input, shape index: {}]
  %s6 = inlined_call_operand.vmem [shape: f32[32,128], index: 6, kind: input, shape index: {}]
  %s7 = inlined_call_operand.vmem [shape: f32[1,128], index: 7, kind: input, shape index: {}]
  %s8 = inlined_call_operand.hbm [shape: f32[32,64], index: 8, kind: input, shape index: {}]
  %s9 = inlined_call_operand.vmem [shape: f32[1,64], index: 9, kind: input, shape index: {}]
  %s10 = inlined_call_operand.hbm [shape: f32[64,64], index: 10, kind: output, shape index: {0}]
  %s11 = inlined_call_operand.vmem [shape: f32[64,32], index: 11, kind: output, shape index: {1}]
  %s12 = inlined_call_operand.hbm [shape: f32[2,8,32], index: 12, kind: output, shape index: {2}]
  %s13 = inlined_call_operand.hbm [shape: f32[2,8,32], index: 13, kind: output, shape index: {3}]
  %14 = xla_tuple %s10, %s11, %s12, %s13
  %s15 = sld [smem:[#allocation0]]
  $region78: #{tpu_custom_call.1} parent=0
    _
  %s17 = ssub.s32 1, %s15
  %s18 = scalar_select 0, %s17, %s15
  $region1: #{tpu_custom_call.1} parent=0
    #allocation2 [shape = 'u8[16384]{0}', space=vmem, size = 0x4000, scoped, tag = 'input window, operand 8, single buffered']
    #allocation3 [shape = 's32[1]{0}', space=sflag, size = 0x4, scoped, tag = 'scoped memory for tpu_custom_call.1']
    #allocation4 [shape = 's32[1]{0}', space=sflag, size = 0x4, scoped, tag = 'scoped memory for tpu_custom_call.1']
    #allocation5 [shape = 'u8[32768]{0}', space=vmem, size = 0x8000, scoped, tag = 'output window, operand 0, single buffered']
    #allocation6 [shape = 'u8[8192]{0}', space=vmem, size = 0x2000, scoped, tag = 'output window, operand 2, single buffered']
    #allocation7 [shape = 's32[1]{0}', space=sflag, size = 0x4, scoped, tag = 'scoped memory for tpu_custom_call.1']
    #allocation8 [shape = 'u8[8192]{0}', space=vmem, size = 0x2000, scoped, tag = 'output window, operand 3, single buffered']
    %19 = vsyncpa [#allocation3], 0
    %20 = vsyncpa [#allocation4], 0
    %21 = vsyncpa [#allocation7], 0
    // Predicated region
    $region2: #{tpu_custom_call.1} parent=1 // pred_check
      _
    $region3: #{tpu_custom_call.1} parent=1 // pred_check_branch
      %23 = sbr.rel (0) target = $region5
    $region4: #{tpu_custom_call.1} parent=1 // pred_region
      _
    $region5: #{tpu_custom_call.1} parent=1 // pred_fallthru
      _
    // Predicated region
    $region6: #{tpu_custom_call.1} parent=1 // pred_check
      _
    $region7: #{tpu_custom_call.1} parent=1 // pred_check_branch
      %25 = sbr.rel (0) target = $region9
    $region8: #{tpu_custom_call.1} parent=1 // pred_region
      _
    $region9: #{tpu_custom_call.1} parent=1 // pred_fallthru
      _
    // Predicated region
    $region10: #{tpu_custom_call.1} parent=1 // pred_check
      _
    $region11: #{tpu_custom_call.1} parent=1 // pred_check_branch
      %27 = sbr.rel (0) target = $region13
    $region12: #{tpu_custom_call.1} parent=1 // pred_region
      _
    $region13: #{tpu_custom_call.1} parent=1 // pred_fallthru
      _
    // Predicated region
    $region14: #{tpu_custom_call.1} parent=1 // pred_check
      _
    $region15: #{tpu_custom_call.1} parent=1 // pred_check_branch
      %29 = sbr.rel (0) target = $region17
    $region16: #{tpu_custom_call.1} parent=1 // pred_region
      _
    $region17: #{tpu_custom_call.1} parent=1 // pred_fallthru
      _
    // Predicated region
    $region18: #{tpu_custom_call.1} parent=1 // pred_check
      _
    $region19: #{tpu_custom_call.1} parent=1 // pred_check_branch
      %31 = sbr.rel (0) target = $region21
    $region20: #{tpu_custom_call.1} parent=1 // pred_region
      _
    $region21: #{tpu_custom_call.1} parent=1 // pred_fallthru
      _
    // Predicated region
    $region22: #{tpu_custom_call.1} parent=1 // pred_check
      _
    $region23: #{tpu_custom_call.1} parent=1 // pred_check_branch
      %33 = sbr.rel (0) target = $region25
    $region24: #{tpu_custom_call.1} parent=1 // pred_region
      _
    $region25: #{tpu_custom_call.1} parent=1 // pred_fallthru
      _
    // Predicated region
    $region26: #{tpu_custom_call.1} parent=1 // pred_check
      _
    $region27: #{tpu_custom_call.1} parent=1 // pred_check_branch
      %35 = sbr.rel (0) target = $region29
    $region28: #{tpu_custom_call.1} parent=1 // pred_region
      _
    $region29: #{tpu_custom_call.1} parent=1 // pred_fallthru
      _
    // Predicated region
    $region30: #{tpu_custom_call.1} parent=1 // pred_check
      _
    $region31: #{tpu_custom_call.1} parent=1 // pred_check_branch
      %37 = sbr.rel (0) target = $region33
    $region32: #{tpu_custom_call.1} parent=1 // pred_region
      _
    $region33: #{tpu_custom_call.1} parent=1 // pred_fallthru
      _
    // Predicated region
    $region34: #{tpu_custom_call.1} parent=1 // pred_check
      _
    $region35: #{tpu_custom_call.1} parent=1 // pred_check_branch
      %39 = sbr.rel (0) target = $region37
    $region36: #{tpu_custom_call.1} parent=1 // pred_region
      %s41 = ssub.s32 512, 512
      %42 = vsyncadd [#allocation3], %s41
      %s43 = sshll.u32 [#allocation2], 4
      %s44 = int_to_ptr.vmem [resolvable:$true] %s43
      %49 = dma.hbm_to_vmem [thread:$0]  %s8, 512, %s44, [#allocation3], 128, 128, 8
    $region37: #{tpu_custom_call.1} parent=1 // pred_fallthru
      _
    // Predicated region
    $region38: #{tpu_custom_call.1} parent=1 // pred_check
      _
    $region39: #{tpu_custom_call.1} parent=1 // pred_check_branch
      %51 = sbr.rel (0) target = $region41
    $region40: #{tpu_custom_call.1} parent=1 // pred_region
      _
    $region41: #{tpu_custom_call.1} parent=1 // pred_fallthru
      _
    // Predicated region
    $region42: #{tpu_custom_call.1} parent=1 // pred_check
      _
    $region43: #{tpu_custom_call.1} parent=1 // pred_check_branch
      %53 = sbr.rel (0) target = $region45
    $region44: #{tpu_custom_call.1} parent=1 // pred_region
      %54 = dma.done [#allocation3], 512
    $region45: #{tpu_custom_call.1} parent=1 // pred_fallthru
      _
    %v55 = vld [vmem:[%s0] sm:$0xff]
    %v56 = vld [vmem:[%s0 + $0x8] sm:$0xff]
    %v57 = vld [vmem:[%s0 + $0x10] sm:$0xff]
    %v58 = vld [vmem:[%s0 + $0x18] sm:$0xff]
    %v59 = vld [vmem:[%s0 + $0x20] sm:$0xff]
    %v60 = vld [vmem:[%s0 + $0x28] sm:$0xff]
    %v61 = vld [vmem:[%s0 + $0x30] sm:$0xff]
    %v62 = vld [vmem:[%s0 + $0x38] sm:$0xff]
    %v63 = vlaneseq
    %v64 = vand.u32 %v63, 127
    %65 = vset.pattern.permute.xlu0 0
    %66 = vperm.xlu0 %65, %v55
    %v67 = vpop.permute.xlu0 %66
    %68 = vset.pattern.permute.xlu0 0
    %69 = vperm.xlu0 %68, %v56
    %v70 = vpop.permute.xlu0 %69
    %71 = vset.pattern.permute.xlu0 0
    %72 = vperm.xlu0 %71, %v57
    %v73 = vpop.permute.xlu0 %72
    %74 = vset.pattern.permute.xlu0 0
    %75 = vperm.xlu0 %74, %v58
    %v76 = vpop.permute.xlu0 %75
    %77 = vset.pattern.permute.xlu0 0
    %78 = vperm.xlu0 %77, %v59
    %v79 = vpop.permute.xlu0 %78
    %80 = vset.pattern.permute.xlu0 0
    %81 = vperm.xlu0 %80, %v60
    %v82 = vpop.permute.xlu0 %81
    %83 = vset.pattern.permute.xlu0 0
    %84 = vperm.xlu0 %83, %v61
    %v85 = vpop.permute.xlu0 %84
    %86 = vset.pattern.permute.xlu0 0
    %87 = vperm.xlu0 %86, %v62
    %v88 = vpop.permute.xlu0 %87
    %vm89 = vcmp.eq.s32.totalorder %v64, %v67
    %vm90 = vcmp.eq.s32.totalorder %v64, %v70
    %vm91 = vcmp.eq.s32.totalorder %v64, %v73
    %vm92 = vcmp.eq.s32.totalorder %v64, %v76
    %vm93 = vcmp.eq.s32.totalorder %v64, %v79
    %vm94 = vcmp.eq.s32.totalorder %v64, %v82
    %vm95 = vcmp.eq.s32.totalorder %v64, %v85
    %vm96 = vcmp.eq.s32.totalorder %v64, %v88
    %v97 = vsel %vm89, 1, 0
    %v98 = vsel %vm90, 1, 0
    %v99 = vsel %vm91, 1, 0
    %v100 = vsel %vm92, 1, 0
    %v101 = vsel %vm93, 1, 0
    %v102 = vsel %vm94, 1, 0
    %v103 = vsel %vm95, 1, 0
    %v104 = vsel %vm96, 1, 0
    %v105 = vcvt.s32.f32 %v97
    %v106 = vcvt.s32.f32 %v98
    %v107 = vcvt.s32.f32 %v99
    %v108 = vcvt.s32.f32 %v100
    %v109 = vcvt.s32.f32 %v101
    %v110 = vcvt.s32.f32 %v102
    %v111 = vcvt.s32.f32 %v103
    %v112 = vcvt.s32.f32 %v104
    %v113 = vld [vmem:[%s1] sm:$0xff]
    %v114 = vld [vmem:[%s1 + $0x8] sm:$0xff]
    %v115 = vld [vmem:[%s1 + $0x10] sm:$0xff]
    %v116 = vld [vmem:[%s1 + $0x18] sm:$0xff]
    %v117 = vld [vmem:[%s1 + $0x20] sm:$0xff]
    %v118 = vld [vmem:[%s1 + $0x28] sm:$0xff]
    %v119 = vld [vmem:[%s1 + $0x30] sm:$0xff]
    %v120 = vld [vmem:[%s1 + $0x38] sm:$0xff]
    %vm121 = vcmask 523264
    %v123 = vsel %vm121, %v105, 0
    %v126 = vsel %vm121, %v106, 0
    %v129 = vsel %vm121, %v107, 0
    %v132 = vsel %vm121, %v108, 0
    %v135 = vsel %vm121, %v109, 0
    %v138 = vsel %vm121, %v110, 0
    %v141 = vsel %vm121, %v111, 0
    %v144 = vsel %vm121, %v112, 0
    %146 = vmatprep.subr.mxu0 0.0
    %147 = vmatpush1.msra.mxu0 %v113
    %148 = vmatprep.subr.mxu0 0.0
    %149 = vmatpush1.msra.mxu0 %v114
    %150 = vmatprep.subr.mxu0 0.0
    %151 = vmatpush1.msra.mxu0 %v115
    %152 = vmatprep.subr.mxu0 0.0
    %153 = vmatpush1.msra.mxu0 %v116
    %154 = vmatprep.subr.mxu0 0.0
    %155 = vmatpush1.msra.mxu0 %v117
    %156 = vmatprep.subr.mxu0 0.0
    %157 = vmatpush1.msra.mxu0 %v118
    %158 = vmatprep.subr.mxu0 0.0
    %159 = vmatpush1.msra.mxu0 %v119
    %160 = vmatprep.subr.mxu0 0.0
    %161 = vmatpush1.msra.mxu0 %v120
    %162 = vmatprep.subr.mxu0 0.0
    %163 = vmatpush1.msra.mxu0 0.0
    %164 = vmatprep.subr.mxu0 0.0
    %165 = vmatpush1.msra.mxu0 0.0
    %166 = vmatprep.subr.mxu0 0.0
    %167 = vmatpush1.msra.mxu0 0.0
    %168 = vmatprep.subr.mxu0 0.0
    %169 = vmatpush1.msra.mxu0 0.0
    %170 = vmatprep.subr.mxu0 0.0
    %171 = vmatpush1.msra.mxu0 0.0
    %172 = vmatprep.subr.mxu0 0.0
    %173 = vmatpush1.msra.mxu0 0.0
    %174 = vmatprep.subr.mxu0 0.0
    %175 = vmatpush1.msra.mxu0 0.0
    %176 = vmatprep.subr.mxu0 0.0
    %177 = vmatpush1.msra.mxu0 0.0
    %178 = vmatprep.subr.mxu0 0.0
    %179 = vmatpush1.msra.mxu0 0.0
    %180 = vmatprep.subr.mxu0 0.0
    %181 = vmatpush1.msra.mxu0 0.0
    %182 = vmatprep.subr.mxu0 0.0
    %183 = vmatpush1.msra.mxu0 0.0
    %184 = vmatprep.subr.mxu0 0.0
    %185 = vmatpush1.msra.mxu0 0.0
    %186 = vmatprep.subr.mxu0 0.0
    %187 = vmatpush1.msra.mxu0 0.0
    %188 = vmatprep.subr.mxu0 0.0
    %189 = vmatpush1.msra.mxu0 0.0
    %190 = vmatprep.subr.mxu0 0.0
    %191 = vmatpush1.msra.mxu0 0.0
    %192 = vmatprep.subr.mxu0 0.0
    %193 = vmatpush1.msra.mxu0 0.0
    %194 = vmatprep.subr.mxu0 0.0
    %195 = vmatpush1.msra.mxu0 0.0
    %196 = vmatprep.subr.mxu0 0.0
    %197 = vmatpush1.msra.mxu0 0.0
    %198 = vmatprep.subr.mxu0 0.0
    %199 = vmatpush1.msra.mxu0 0.0
    %200 = vmatprep.subr.mxu0 0.0
    %201 = vmatpush1.msra.mxu0 0.0
    %202 = vmatprep.subr.mxu0 0.0
    %203 = vmatpush1.msra.mxu0 0.0
    %204 = vmatprep.subr.mxu0 0.0
    %205 = vmatpush1.msra.mxu0 0.0
    %206 = vmatprep.subr.mxu0 0.0
    %207 = vmatpush1.msra.mxu0 0.0
    %208 = vmatprep.subr.mxu0 0.0
    %209 = vmatpush1.msra.mxu0 0.0
    %210 = vmatprep.mubr.f32.mxu0 0.0
    %211 = vmatmul.mubr.f32.gmra.mrb[0].mxu0 %v123
    %v212 = vpop.f32.mrb[0].mxu0
    %v213 = vadd.f32 0.0, %v212
    %v214 = vpop.f32.mrb[0].mxu0
    %215 = vmatprep.mubr.f32.mxu0 0.0
    %216 = vmatmul.mubr.f32.gmra.mrb[0].mxu0 %v126
    %v217 = vpop.f32.mrb[0].mxu0
    %v218 = vadd.f32 0.0, %v217
    %v219 = vpop.f32.mrb[0].mxu0
    %220 = vmatprep.mubr.f32.mxu0 0.0
    %221 = vmatmul.mubr.f32.gmra.mrb[0].mxu0 %v129
    %v222 = vpop.f32.mrb[0].mxu0
    %v223 = vadd.f32 0.0, %v222
    %v224 = vpop.f32.mrb[0].mxu0
    %225 = vmatprep.mubr.f32.mxu0 0.0
    %226 = vmatmul.mubr.f32.gmra.mrb[0].mxu0 %v132
    %v227 = vpop.f32.mrb[0].mxu0
    %v228 = vadd.f32 0.0, %v227
    %v229 = vpop.f32.mrb[0].mxu0
    %230 = vmatprep.mubr.f32.mxu0 0.0
    %231 = vmatmul.mubr.f32.gmra.mrb[0].mxu0 %v135
    %v232 = vpop.f32.mrb[0].mxu0
    %v233 = vadd.f32 0.0, %v232
    %v234 = vpop.f32.mrb[0].mxu0
    %235 = vmatprep.mubr.f32.mxu0 0.0
    %236 = vmatmul.mubr.f32.gmra.mrb[0].mxu0 %v138
    %v237 = vpop.f32.mrb[0].mxu0
    %v238 = vadd.f32 0.0, %v237
    %v239 = vpop.f32.mrb[0].mxu0
    %240 = vmatprep.mubr.f32.mxu0 0.0
    %241 = vmatmul.mubr.f32.gmra.mrb[0].mxu0 %v141
    %v242 = vpop.f32.mrb[0].mxu0
    %v243 = vadd.f32 0.0, %v242
    %v244 = vpop.f32.mrb[0].mxu0
    %245 = vmatprep.mubr.f32.mxu0 0.0
    %246 = vmatmul.mubr.f32.gmra.mrb[0].mxu0 %v144
    %v247 = vpop.f32.mrb[0].mxu0
    %v248 = vadd.f32 0.0, %v247
    %v249 = vpop.f32.mrb[0].mxu0
    %250 = vdwg.mxu0
    %v251 = vld [vmem:[%s2] sm:$0xff]
    %v252 = vld [vmem:[%s2 + $0x8] sm:$0xff]
    %v253 = vld [vmem:[%s2 + $0x10] sm:$0xff]
    %v254 = vld [vmem:[%s2 + $0x18] sm:$0xff]
    %v255 = vld [vmem:[%s3] sm:$0xff]
    %v256 = vld [vmem:[%s3 + $0x8] sm:$0xff]
    %v257 = vld [vmem:[%s3 + $0x10] sm:$0xff]
    %v258 = vld [vmem:[%s3 + $0x18] sm:$0xff]
    %v259 = vld [vmem:[%s4] sm:$0x1]
    %v261 = vlaneseq
    %v262 = vshrl.u32 %v261, 7
    %v263 = vsub.s32 0, %v262
    %v264 = vrot.slane %v259, %v263
    %vm266 = vcmask 261120
    %v268 = vsel %vm266, %v213, 0
    %v271 = vsel %vm266, %v218, 0
    %v274 = vsel %vm266, %v223, 0
    %v277 = vsel %vm266, %v228, 0
    %v280 = vsel %vm266, %v233, 0
    %v283 = vsel %vm266, %v238, 0
    %v286 = vsel %vm266, %v243, 0
    %v289 = vsel %vm266, %v248, 0
    %291 = vmatprep.subr.mxu0 0.0
    %292 = vmatpush1.msra.mxu0 %v251
    %293 = vmatprep.subr.mxu0 0.0
    %294 = vmatpush1.msra.mxu0 %v252
    %295 = vmatprep.subr.mxu0 0.0
    %296 = vmatpush1.msra.mxu0 %v253
    %297 = vmatprep.subr.mxu0 0.0
    %298 = vmatpush1.msra.mxu0 %v254
    %299 = vmatprep.subr.mxu0 0.0
    %300 = vmatpush1.msra.mxu0 0.0
    %301 = vmatprep.subr.mxu0 0.0
    %302 = vmatpush1.msra.mxu0 0.0
    %303 = vmatprep.subr.mxu0 0.0
    %304 = vmatpush1.msra.mxu0 0.0
    %305 = vmatprep.subr.mxu0 0.0
    %306 = vmatpush1.msra.mxu0 0.0
    %307 = vmatprep.subr.mxu0 0.0
    %308 = vmatpush1.msra.mxu0 0.0
    %309 = vmatprep.subr.mxu0 0.0
    %310 = vmatpush1.msra.mxu0 0.0
    %311 = vmatprep.subr.mxu0 0.0
    %312 = vmatpush1.msra.mxu0 0.0
    %313 = vmatprep.subr.mxu0 0.0
    %314 = vmatpush1.msra.mxu0 0.0
    %315 = vmatprep.subr.mxu0 0.0
    %316 = vmatpush1.msra.mxu0 0.0
    %317 = vmatprep.subr.mxu0 0.0
    %318 = vmatpush1.msra.mxu0 0.0
    %319 = vmatprep.subr.mxu0 0.0
    %320 = vmatpush1.msra.mxu0 0.0
    %321 = vmatprep.subr.mxu0 0.0
    %322 = vmatpush1.msra.mxu0 0.0
    %323 = vmatprep.subr.mxu0 0.0
    %324 = vmatpush1.msra.mxu0 0.0
    %325 = vmatprep.subr.mxu0 0.0
    %326 = vmatpush1.msra.mxu0 0.0
    %327 = vmatprep.subr.mxu0 0.0
    %328 = vmatpush1.msra.mxu0 0.0
    %329 = vmatprep.subr.mxu0 0.0
    %330 = vmatpush1.msra.mxu0 0.0
    %331 = vmatprep.subr.mxu0 0.0
    %332 = vmatpush1.msra.mxu0 0.0
    %333 = vmatprep.subr.mxu0 0.0
    %334 = vmatpush1.msra.mxu0 0.0
    %335 = vmatprep.subr.mxu0 0.0
    %336 = vmatpush1.msra.mxu0 0.0
    %337 = vmatprep.subr.mxu0 0.0
    %338 = vmatpush1.msra.mxu0 0.0
    %339 = vmatprep.subr.mxu0 0.0
    %340 = vmatpush1.msra.mxu0 0.0
    %341 = vmatprep.subr.mxu0 0.0
    %342 = vmatpush1.msra.mxu0 0.0
    %343 = vmatprep.subr.mxu0 0.0
    %344 = vmatpush1.msra.mxu0 0.0
    %345 = vmatprep.subr.mxu0 0.0
    %346 = vmatpush1.msra.mxu0 0.0
    %347 = vmatprep.subr.mxu0 0.0
    %348 = vmatpush1.msra.mxu0 0.0
    %349 = vmatprep.subr.mxu0 0.0
    %350 = vmatpush1.msra.mxu0 0.0
    %351 = vmatprep.subr.mxu0 0.0
    %352 = vmatpush1.msra.mxu0 0.0
    %353 = vmatprep.subr.mxu0 0.0
    %354 = vmatpush1.msra.mxu0 0.0
    %355 = vmatprep.mubr.f32.mxu0 0.0
    %356 = vmatmul.mubr.f32.gmra.mrb[0].mxu0 %v268
    %v357 = vpop.f32.mrb[0].mxu0
    %v358 = vadd.f32 %v264, %v357
    %v359 = vpop.f32.mrb[0].mxu0
    %360 = vmatprep.mubr.f32.mxu0 0.0
    %361 = vmatmul.mubr.f32.gmra.mrb[0].mxu0 %v271
    %v362 = vpop.f32.mrb[0].mxu0
    %v363 = vadd.f32 %v264, %v362
    %v364 = vpop.f32.mrb[0].mxu0
    %365 = vmatprep.mubr.f32.mxu0 0.0
    %366 = vmatmul.mubr.f32.gmra.mrb[0].mxu0 %v274
    %v367 = vpop.f32.mrb[0].mxu0
    %v368 = vadd.f32 %v264, %v367
    %v369 = vpop.f32.mrb[0].mxu0
    %370 = vmatprep.mubr.f32.mxu0 0.0
    %371 = vmatmul.mubr.f32.gmra.mrb[0].mxu0 %v277
    %v372 = vpop.f32.mrb[0].mxu0
    %v373 = vadd.f32 %v264, %v372
    %v374 = vpop.f32.mrb[0].mxu0
    %375 = vmatprep.mubr.f32.mxu0 0.0
    %376 = vmatmul.mubr.f32.gmra.mrb[0].mxu0 %v280
    %v377 = vpop.f32.mrb[0].mxu0
    %v378 = vadd.f32 %v264, %v377
    %v379 = vpop.f32.mrb[0].mxu0
    %380 = vmatprep.mubr.f32.mxu0 0.0
    %381 = vmatmul.mubr.f32.gmra.mrb[0].mxu0 %v283
    %v382 = vpop.f32.mrb[0].mxu0
    %v383 = vadd.f32 %v264, %v382
    %v384 = vpop.f32.mrb[0].mxu0
    %385 = vmatprep.mubr.f32.mxu0 0.0
    %386 = vmatmul.mubr.f32.gmra.mrb[0].mxu0 %v286
    %v387 = vpop.f32.mrb[0].mxu0
    %v388 = vadd.f32 %v264, %v387
    %v389 = vpop.f32.mrb[0].mxu0
    %390 = vmatprep.mubr.f32.mxu0 0.0
    %391 = vmatmul.mubr.f32.gmra.mrb[0].mxu0 %v289
    %v392 = vpop.f32.mrb[0].mxu0
    %v393 = vadd.f32 %v264, %v392
    %v394 = vpop.f32.mrb[0].mxu0
    %395 = vdwg.mxu0
    %v397 = vsel %vm266, 0.0, 0
    %399 = vmatprep.subr.mxu0 0.0
    %400 = vmatpush1.msra.mxu0 %v255
    %401 = vmatprep.subr.mxu0 0.0
    %402 = vmatpush1.msra.mxu0 %v256
    %403 = vmatprep.subr.mxu0 0.0
    %404 = vmatpush1.msra.mxu0 %v257
    %405 = vmatprep.subr.mxu0 0.0
    %406 = vmatpush1.msra.mxu0 %v258
    %407 = vmatprep.subr.mxu0 0.0
    %408 = vmatpush1.msra.mxu0 0.0
    %409 = vmatprep.subr.mxu0 0.0
    %410 = vmatpush1.msra.mxu0 0.0
    %411 = vmatprep.subr.mxu0 0.0
    %412 = vmatpush1.msra.mxu0 0.0
    %413 = vmatprep.subr.mxu0 0.0
    %414 = vmatpush1.msra.mxu0 0.0
    %415 = vmatprep.subr.mxu0 0.0
    %416 = vmatpush1.msra.mxu0 0.0
    %417 = vmatprep.subr.mxu0 0.0
    %418 = vmatpush1.msra.mxu0 0.0
    %419 = vmatprep.subr.mxu0 0.0
    %420 = vmatpush1.msra.mxu0 0.0
    %421 = vmatprep.subr.mxu0 0.0
    %422 = vmatpush1.msra.mxu0 0.0
    %423 = vmatprep.subr.mxu0 0.0
    %424 = vmatpush1.msra.mxu0 0.0
    %425 = vmatprep.subr.mxu0 0.0
    %426 = vmatpush1.msra.mxu0 0.0
    %427 = vmatprep.subr.mxu0 0.0
    %428 = vmatpush1.msra.mxu0 0.0
    %429 = vmatprep.subr.mxu0 0.0
    %430 = vmatpush1.msra.mxu0 0.0
    %431 = vmatprep.subr.mxu0 0.0
    %432 = vmatpush1.msra.mxu0 0.0
    %433 = vmatprep.subr.mxu0 0.0
    %434 = vmatpush1.msra.mxu0 0.0
    %435 = vmatprep.subr.mxu0 0.0
    %436 = vmatpush1.msra.mxu0 0.0
    %437 = vmatprep.subr.mxu0 0.0
    %438 = vmatpush1.msra.mxu0 0.0
    %439 = vmatprep.subr.mxu0 0.0
    %440 = vmatpush1.msra.mxu0 0.0
    %441 = vmatprep.subr.mxu0 0.0
    %442 = vmatpush1.msra.mxu0 0.0
    %443 = vmatprep.subr.mxu0 0.0
    %444 = vmatpush1.msra.mxu0 0.0
    %445 = vmatprep.subr.mxu0 0.0
    %446 = vmatpush1.msra.mxu0 0.0
    %447 = vmatprep.subr.mxu0 0.0
    %448 = vmatpush1.msra.mxu0 0.0
    %449 = vmatprep.subr.mxu0 0.0
    %450 = vmatpush1.msra.mxu0 0.0
    %451 = vmatprep.subr.mxu0 0.0
    %452 = vmatpush1.msra.mxu0 0.0
    %453 = vmatprep.subr.mxu0 0.0
    %454 = vmatpush1.msra.mxu0 0.0
    %455 = vmatprep.subr.mxu0 0.0
    %456 = vmatpush1.msra.mxu0 0.0
    %457 = vmatprep.subr.mxu0 0.0
    %458 = vmatpush1.msra.mxu0 0.0
    %459 = vmatprep.subr.mxu0 0.0
    %460 = vmatpush1.msra.mxu0 0.0
    %461 = vmatprep.subr.mxu0 0.0
    %462 = vmatpush1.msra.mxu0 0.0
    %463 = vmatprep.mubr.f32.mxu0 0.0
    %464 = vmatmul.mubr.f32.gmra.mrb[0].mxu0 %v397
    %v465 = vpop.f32.mrb[0].mxu0
    %v466 = vadd.f32 0.0, %v465
    %v467 = vpop.f32.mrb[0].mxu0
    %468 = vdwg.mxu0
    %v469 = vadd.f32 %v358, %v466
    %v470 = vxor.u32 %v469, 2147483648
    %v471 = vmul.f32 %v470, 1.442695
    %v472 = vpow.pop %v471
    %v473 = vadd.f32 %v472, 1.0
    %v474 = vrcp.pop %v473
    %v475 = vmul.f32 1.0, %v474
    %v476 = vtanh.pop %v469
    %v477 = vmul.f32 %v475, 0.0
    %479 = vrot.lane.b32.xlu0 %v476, 64
    %v480 = vpop.permute.xlu0 %479
    %v482 = vmul.f32 %v475, %v480
    %484 = vrot.lane.b32.xlu0 %v482, 32
    %v485 = vpop.permute.xlu0 %484
    %v487 = vadd.f32 %v477, %v485
    %v488 = vtanh.pop %v487
    %490 = vrot.lane.b32.xlu0 %v488, 64
    %v491 = vpop.permute.xlu0 %490
    %v493 = vmul.f32 %v475, %v491
    %495 = vrot.lane.b32.xlu0 %v493, 32
    %v496 = vpop.permute.xlu0 %495
    %498 = vst.msk [vmem:[%s11] sm:$0xff] %vm266, %v496
    %v499 = vsel %vm266, %v496, 0
    %501 = vmatprep.subr.mxu0 0.0
    %502 = vmatpush1.msra.mxu0 %v255
    %503 = vmatprep.subr.mxu0 0.0
    %504 = vmatpush1.msra.mxu0 %v256
    %505 = vmatprep.subr.mxu0 0.0
    %506 = vmatpush1.msra.mxu0 %v257
    %507 = vmatprep.subr.mxu0 0.0
    %508 = vmatpush1.msra.mxu0 %v258
    %509 = vmatprep.subr.mxu0 0.0
    %510 = vmatpush1.msra.mxu0 0.0
    %511 = vmatprep.subr.mxu0 0.0
    %512 = vmatpush1.msra.mxu0 0.0
    %513 = vmatprep.subr.mxu0 0.0
    %514 = vmatpush1.msra.mxu0 0.0
    %515 = vmatprep.subr.mxu0 0.0
    %516 = vmatpush1.msra.mxu0 0.0
    %517 = vmatprep.subr.mxu0 0.0
    %518 = vmatpush1.msra.mxu0 0.0
    %519 = vmatprep.subr.mxu0 0.0
    %520 = vmatpush1.msra.mxu0 0.0
    %521 = vmatprep.subr.mxu0 0.0
    %522 = vmatpush1.msra.mxu0 0.0
    %523 = vmatprep.subr.mxu0 0.0
    %524 = vmatpush1.msra.mxu0 0.0
    %525 = vmatprep.subr.mxu0 0.0
    %526 = vmatpush1.msra.mxu0 0.0
    %527 = vmatprep.subr.mxu0 0.0
    %528 = vmatpush1.msra.mxu0 0.0
    %529 = vmatprep.subr.mxu0 0.0
    %530 = vmatpush1.msra.mxu0 0.0
    %531 = vmatprep.subr.mxu0 0.0
    %532 = vmatpush1.msra.mxu0 0.0
    %533 = vmatprep.subr.mxu0 0.0
    %534 = vmatpush1.msra.mxu0 0.0
    %535 = vmatprep.subr.mxu0 0.0
    %536 = vmatpush1.msra.mxu0 0.0
    %537 = vmatprep.subr.mxu0 0.0
    %538 = vmatpush1.msra.mxu0 0.0
    %539 = vmatprep.subr.mxu0 0.0
    %540 = vmatpush1.msra.mxu0 0.0
    %541 = vmatprep.subr.mxu0 0.0
    %542 = vmatpush1.msra.mxu0 0.0
    %543 = vmatprep.subr.mxu0 0.0
    %544 = vmatpush1.msra.mxu0 0.0
    %545 = vmatprep.subr.mxu0 0.0
    %546 = vmatpush1.msra.mxu0 0.0
    %547 = vmatprep.subr.mxu0 0.0
    %548 = vmatpush1.msra.mxu0 0.0
    %549 = vmatprep.subr.mxu0 0.0
    %550 = vmatpush1.msra.mxu0 0.0
    %551 = vmatprep.subr.mxu0 0.0
    %552 = vmatpush1.msra.mxu0 0.0
    %553 = vmatprep.subr.mxu0 0.0
    %554 = vmatpush1.msra.mxu0 0.0
    %555 = vmatprep.subr.mxu0 0.0
    %556 = vmatpush1.msra.mxu0 0.0
    %557 = vmatprep.subr.mxu0 0.0
    %558 = vmatpush1.msra.mxu0 0.0
    %559 = vmatprep.subr.mxu0 0.0
    %560 = vmatpush1.msra.mxu0 0.0
    %561 = vmatprep.subr.mxu0 0.0
    %562 = vmatpush1.msra.mxu0 0.0
    %563 = vmatprep.subr.mxu0 0.0
    %564 = vmatpush1.msra.mxu0 0.0
    %565 = vmatprep.mubr.f32.mxu0 0.0
    %566 = vmatmul.mubr.f32.gmra.mrb[0].mxu0 %v499
    %v567 = vpop.f32.mrb[0].mxu0
    %v568 = vadd.f32 0.0, %v567
    %v569 = vpop.f32.mrb[0].mxu0
    %570 = vdwg.mxu0
    %v571 = vadd.f32 %v363, %v568
    %v572 = vxor.u32 %v571, 2147483648
    %v573 = vmul.f32 %v572, 1.442695
    %v574 = vpow.pop %v573
    %v575 = vadd.f32 %v574, 1.0
    %v576 = vrcp.pop %v575
    %v577 = vmul.f32 1.0, %v576
    %v578 = vtanh.pop %v571
    %v579 = vmul.f32 %v577, %v487
    %581 = vrot.lane.b32.xlu0 %v578, 64
    %v582 = vpop.permute.xlu0 %581
    %v584 = vmul.f32 %v577, %v582
    %586 = vrot.lane.b32.xlu0 %v584, 32
    %v587 = vpop.permute.xlu0 %586
    %v589 = vadd.f32 %v579, %v587
    %v590 = vtanh.pop %v589
    %592 = vrot.lane.b32.xlu0 %v590, 64
    %v593 = vpop.permute.xlu0 %592
    %v595 = vmul.f32 %v577, %v593
    %597 = vrot.lane.b32.xlu0 %v595, 32
    %v598 = vpop.permute.xlu0 %597
    %600 = vst.msk [vmem:[%s11 + $0x8] sm:$0xff] %vm266, %v598
    %v601 = vsel %vm266, %v598, 0
    %603 = vmatprep.subr.mxu0 0.0
    %604 = vmatpush1.msra.mxu0 %v255
    %605 = vmatprep.subr.mxu0 0.0
    %606 = vmatpush1.msra.mxu0 %v256
    %607 = vmatprep.subr.mxu0 0.0
    %608 = vmatpush1.msra.mxu0 %v257
    %609 = vmatprep.subr.mxu0 0.0
    %610 = vmatpush1.msra.mxu0 %v258
    %611 = vmatprep.subr.mxu0 0.0
    %612 = vmatpush1.msra.mxu0 0.0
    %613 = vmatprep.subr.mxu0 0.0
    %614 = vmatpush1.msra.mxu0 0.0
    %615 = vmatprep.subr.mxu0 0.0
    %616 = vmatpush1.msra.mxu0 0.0
    %617 = vmatprep.subr.mxu0 0.0
    %618 = vmatpush1.msra.mxu0 0.0
    %619 = vmatprep.subr.mxu0 0.0
    %620 = vmatpush1.msra.mxu0 0.0
    %621 = vmatprep.subr.mxu0 0.0
    %622 = vmatpush1.msra.mxu0 0.0
    %623 = vmatprep.subr.mxu0 0.0
    %624 = vmatpush1.msra.mxu0 0.0
    %625 = vmatprep.subr.mxu0 0.0
    %626 = vmatpush1.msra.mxu0 0.0
    %627 = vmatprep.subr.mxu0 0.0
    %628 = vmatpush1.msra.mxu0 0.0
    %629 = vmatprep.subr.mxu0 0.0
    %630 = vmatpush1.msra.mxu0 0.0
    %631 = vmatprep.subr.mxu0 0.0
    %632 = vmatpush1.msra.mxu0 0.0
    %633 = vmatprep.subr.mxu0 0.0
    %634 = vmatpush1.msra.mxu0 0.0
    %635 = vmatprep.subr.mxu0 0.0
    %636 = vmatpush1.msra.mxu0 0.0
    %637 = vmatprep.subr.mxu0 0.0
    %638 = vmatpush1.msra.mxu0 0.0
    %639 = vmatprep.subr.mxu0 0.0
    %640 = vmatpush1.msra.mxu0 0.0
    %641 = vmatprep.subr.mxu0 0.0
    %642 = vmatpush1.msra.mxu0 0.0
    %643 = vmatprep.subr.mxu0 0.0
    %644 = vmatpush1.msra.mxu0 0.0
    %645 = vmatprep.subr.mxu0 0.0
    %646 = vmatpush1.msra.mxu0 0.0
    %647 = vmatprep.subr.mxu0 0.0
    %648 = vmatpush1.msra.mxu0 0.0
    %649 = vmatprep.subr.mxu0 0.0
    %650 = vmatpush1.msra.mxu0 0.0
    %651 = vmatprep.subr.mxu0 0.0
    %652 = vmatpush1.msra.mxu0 0.0
    %653 = vmatprep.subr.mxu0 0.0
    %654 = vmatpush1.msra.mxu0 0.0
    %655 = vmatprep.subr.mxu0 0.0
    %656 = vmatpush1.msra.mxu0 0.0
    %657 = vmatprep.subr.mxu0 0.0
    %658 = vmatpush1.msra.mxu0 0.0
    %659 = vmatprep.subr.mxu0 0.0
    %660 = vmatpush1.msra.mxu0 0.0
    %661 = vmatprep.subr.mxu0 0.0
    %662 = vmatpush1.msra.mxu0 0.0
    %663 = vmatprep.subr.mxu0 0.0
    %664 = vmatpush1.msra.mxu0 0.0
    %665 = vmatprep.subr.mxu0 0.0
    %666 = vmatpush1.msra.mxu0 0.0
    %667 = vmatprep.mubr.f32.mxu0 0.0
    %668 = vmatmul.mubr.f32.gmra.mrb[0].mxu0 %v601
    %v669 = vpop.f32.mrb[0].mxu0
    %v670 = vadd.f32 0.0, %v669
    %v671 = vpop.f32.mrb[0].mxu0
    %672 = vdwg.mxu0
    %v673 = vadd.f32 %v368, %v670
    %v674 = vxor.u32 %v673, 2147483648
    %v675 = vmul.f32 %v674, 1.442695
    %v676 = vpow.pop %v675
    %v677 = vadd.f32 %v676, 1.0
    %v678 = vrcp.pop %v677
    %v679 = vmul.f32 1.0, %v678
    %v680 = vtanh.pop %v673
    %v681 = vmul.f32 %v679, %v589
    %683 = vrot.lane.b32.xlu0 %v680, 64
    %v684 = vpop.permute.xlu0 %683
    %v686 = vmul.f32 %v679, %v684
    %688 = vrot.lane.b32.xlu0 %v686, 32
    %v689 = vpop.permute.xlu0 %688
    %v691 = vadd.f32 %v681, %v689
    %v692 = vtanh.pop %v691
    %694 = vrot.lane.b32.xlu0 %v692, 64
    %v695 = vpop.permute.xlu0 %694
    %v697 = vmul.f32 %v679, %v695
    %699 = vrot.lane.b32.xlu0 %v697, 32
    %v700 = vpop.permute.xlu0 %699
    %702 = vst.msk [vmem:[%s11 + $0x10] sm:$0xff] %vm266, %v700
    %v703 = vsel %vm266, %v700, 0
    %705 = vmatprep.subr.mxu0 0.0
    %706 = vmatpush1.msra.mxu0 %v255
    %707 = vmatprep.subr.mxu0 0.0
    %708 = vmatpush1.msra.mxu0 %v256
    %709 = vmatprep.subr.mxu0 0.0
    %710 = vmatpush1.msra.mxu0 %v257
    %711 = vmatprep.subr.mxu0 0.0
    %712 = vmatpush1.msra.mxu0 %v258
    %713 = vmatprep.subr.mxu0 0.0
    %714 = vmatpush1.msra.mxu0 0.0
    %715 = vmatprep.subr.mxu0 0.0
    %716 = vmatpush1.msra.mxu0 0.0
    %717 = vmatprep.subr.mxu0 0.0
    %718 = vmatpush1.msra.mxu0 0.0
    %719 = vmatprep.subr.mxu0 0.0
    %720 = vmatpush1.msra.mxu0 0.0
    %721 = vmatprep.subr.mxu0 0.0
    %722 = vmatpush1.msra.mxu0 0.0
    %723 = vmatprep.subr.mxu0 0.0
    %724 = vmatpush1.msra.mxu0 0.0
    %725 = vmatprep.subr.mxu0 0.0
    %726 = vmatpush1.msra.mxu0 0.0
    %727 = vmatprep.subr.mxu0 0.0
    %728 = vmatpush1.msra.mxu0 0.0
    %729 = vmatprep.subr.mxu0 0.0
    %730 = vmatpush1.msra.mxu0 0.0
    %731 = vmatprep.subr.mxu0 0.0
    %732 = vmatpush1.msra.mxu0 0.0
    %733 = vmatprep.subr.mxu0 0.0
    %734 = vmatpush1.msra.mxu0 0.0
    %735 = vmatprep.subr.mxu0 0.0
    %736 = vmatpush1.msra.mxu0 0.0
    %737 = vmatprep.subr.mxu0 0.0
    %738 = vmatpush1.msra.mxu0 0.0
    %739 = vmatprep.subr.mxu0 0.0
    %740 = vmatpush1.msra.mxu0 0.0
    %741 = vmatprep.subr.mxu0 0.0
    %742 = vmatpush1.msra.mxu0 0.0
    %743 = vmatprep.subr.mxu0 0.0
    %744 = vmatpush1.msra.mxu0 0.0
    %745 = vmatprep.subr.mxu0 0.0
    %746 = vmatpush1.msra.mxu0 0.0
    %747 = vmatprep.subr.mxu0 0.0
    %748 = vmatpush1.msra.mxu0 0.0
    %749 = vmatprep.subr.mxu0 0.0
    %750 = vmatpush1.msra.mxu0 0.0
    %751 = vmatprep.subr.mxu0 0.0
    %752 = vmatpush1.msra.mxu0 0.0
    %753 = vmatprep.subr.mxu0 0.0
    %754 = vmatpush1.msra.mxu0 0.0
    %755 = vmatprep.subr.mxu0 0.0
    %756 = vmatpush1.msra.mxu0 0.0
    %757 = vmatprep.subr.mxu0 0.0
    %758 = vmatpush1.msra.mxu0 0.0
    %759 = vmatprep.subr.mxu0 0.0
    %760 = vmatpush1.msra.mxu0 0.0
    %761 = vmatprep.subr.mxu0 0.0
    %762 = vmatpush1.msra.mxu0 0.0
    %763 = vmatprep.subr.mxu0 0.0
    %764 = vmatpush1.msra.mxu0 0.0
    %765 = vmatprep.subr.mxu0 0.0
    %766 = vmatpush1.msra.mxu0 0.0
    %767 = vmatprep.subr.mxu0 0.0
    %768 = vmatpush1.msra.mxu0 0.0
    %769 = vmatprep.mubr.f32.mxu0 0.0
    %770 = vmatmul.mubr.f32.gmra.mrb[0].mxu0 %v703
    %v771 = vpop.f32.mrb[0].mxu0
    %v772 = vadd.f32 0.0, %v771
    %v773 = vpop.f32.mrb[0].mxu0
    %774 = vdwg.mxu0
    %v775 = vadd.f32 %v373, %v772
    %v776 = vxor.u32 %v775, 2147483648
    %v777 = vmul.f32 %v776, 1.442695
    %v778 = vpow.pop %v777
    %v779 = vadd.f32 %v778, 1.0
    %v780 = vrcp.pop %v779
    %v781 = vmul.f32 1.0, %v780
    %v782 = vtanh.pop %v775
    %v783 = vmul.f32 %v781, %v691
    %785 = vrot.lane.b32.xlu0 %v782, 64
    %v786 = vpop.permute.xlu0 %785
    %v788 = vmul.f32 %v781, %v786
    %790 = vrot.lane.b32.xlu0 %v788, 32
    %v791 = vpop.permute.xlu0 %790
    %v793 = vadd.f32 %v783, %v791
    %v794 = vtanh.pop %v793
    %796 = vrot.lane.b32.xlu0 %v794, 64
    %v797 = vpop.permute.xlu0 %796
    %v799 = vmul.f32 %v781, %v797
    %801 = vrot.lane.b32.xlu0 %v799, 32
    %v802 = vpop.permute.xlu0 %801
    %804 = vst.msk [vmem:[%s11 + $0x18] sm:$0xff] %vm266, %v802
    %v805 = vsel %vm266, %v802, 0
    %807 = vmatprep.subr.mxu0 0.0
    %808 = vmatpush1.msra.mxu0 %v255
    %809 = vmatprep.subr.mxu0 0.0
    %810 = vmatpush1.msra.mxu0 %v256
    %811 = vmatprep.subr.mxu0 0.0
    %812 = vmatpush1.msra.mxu0 %v257
    %813 = vmatprep.subr.mxu0 0.0
    %814 = vmatpush1.msra.mxu0 %v258
    %815 = vmatprep.subr.mxu0 0.0
    %816 = vmatpush1.msra.mxu0 0.0
    %817 = vmatprep.subr.mxu0 0.0
    %818 = vmatpush1.msra.mxu0 0.0
    %819 = vmatprep.subr.mxu0 0.0
    %820 = vmatpush1.msra.mxu0 0.0
    %821 = vmatprep.subr.mxu0 0.0
    %822 = vmatpush1.msra.mxu0 0.0
    %823 = vmatprep.subr.mxu0 0.0
    %824 = vmatpush1.msra.mxu0 0.0
    %825 = vmatprep.subr.mxu0 0.0
    %826 = vmatpush1.msra.mxu0 0.0
    %827 = vmatprep.subr.mxu0 0.0
    %828 = vmatpush1.msra.mxu0 0.0
    %829 = vmatprep.subr.mxu0 0.0
    %830 = vmatpush1.msra.mxu0 0.0
    %831 = vmatprep.subr.mxu0 0.0
    %832 = vmatpush1.msra.mxu0 0.0
    %833 = vmatprep.subr.mxu0 0.0
    %834 = vmatpush1.msra.mxu0 0.0
    %835 = vmatprep.subr.mxu0 0.0
    %836 = vmatpush1.msra.mxu0 0.0
    %837 = vmatprep.subr.mxu0 0.0
    %838 = vmatpush1.msra.mxu0 0.0
    %839 = vmatprep.subr.mxu0 0.0
    %840 = vmatpush1.msra.mxu0 0.0
    %841 = vmatprep.subr.mxu0 0.0
    %842 = vmatpush1.msra.mxu0 0.0
    %843 = vmatprep.subr.mxu0 0.0
    %844 = vmatpush1.msra.mxu0 0.0
    %845 = vmatprep.subr.mxu0 0.0
    %846 = vmatpush1.msra.mxu0 0.0
    %847 = vmatprep.subr.mxu0 0.0
    %848 = vmatpush1.msra.mxu0 0.0
    %849 = vmatprep.subr.mxu0 0.0
    %850 = vmatpush1.msra.mxu0 0.0
    %851 = vmatprep.subr.mxu0 0.0
    %852 = vmatpush1.msra.mxu0 0.0
    %853 = vmatprep.subr.mxu0 0.0
    %854 = vmatpush1.msra.mxu0 0.0
    %855 = vmatprep.subr.mxu0 0.0
    %856 = vmatpush1.msra.mxu0 0.0
    %857 = vmatprep.subr.mxu0 0.0
    %858 = vmatpush1.msra.mxu0 0.0
    %859 = vmatprep.subr.mxu0 0.0
    %860 = vmatpush1.msra.mxu0 0.0
    %861 = vmatprep.subr.mxu0 0.0
    %862 = vmatpush1.msra.mxu0 0.0
    %863 = vmatprep.subr.mxu0 0.0
    %864 = vmatpush1.msra.mxu0 0.0
    %865 = vmatprep.subr.mxu0 0.0
    %866 = vmatpush1.msra.mxu0 0.0
    %867 = vmatprep.subr.mxu0 0.0
    %868 = vmatpush1.msra.mxu0 0.0
    %869 = vmatprep.subr.mxu0 0.0
    %870 = vmatpush1.msra.mxu0 0.0
    %871 = vmatprep.mubr.f32.mxu0 0.0
    %872 = vmatmul.mubr.f32.gmra.mrb[0].mxu0 %v805
    %v873 = vpop.f32.mrb[0].mxu0
    %v874 = vadd.f32 0.0, %v873
    %v875 = vpop.f32.mrb[0].mxu0
    %876 = vdwg.mxu0
    %v877 = vadd.f32 %v378, %v874
    %v878 = vxor.u32 %v877, 2147483648
    %v879 = vmul.f32 %v878, 1.442695
    %v880 = vpow.pop %v879
    %v881 = vadd.f32 %v880, 1.0
    %v882 = vrcp.pop %v881
    %v883 = vmul.f32 1.0, %v882
    %v884 = vtanh.pop %v877
    %v885 = vmul.f32 %v883, %v793
    %887 = vrot.lane.b32.xlu0 %v884, 64
    %v888 = vpop.permute.xlu0 %887
    %v890 = vmul.f32 %v883, %v888
    %892 = vrot.lane.b32.xlu0 %v890, 32
    %v893 = vpop.permute.xlu0 %892
    %v895 = vadd.f32 %v885, %v893
    %v896 = vtanh.pop %v895
    %898 = vrot.lane.b32.xlu0 %v896, 64
    %v899 = vpop.permute.xlu0 %898
    %v901 = vmul.f32 %v883, %v899
    %903 = vrot.lane.b32.xlu0 %v901, 32
    %v904 = vpop.permute.xlu0 %903
    %906 = vst.msk [vmem:[%s11 + $0x20] sm:$0xff] %vm266, %v904
    %v907 = vsel %vm266, %v904, 0
    %909 = vmatprep.subr.mxu0 0.0
    %910 = vmatpush1.msra.mxu0 %v255
    %911 = vmatprep.subr.mxu0 0.0
    %912 = vmatpush1.msra.mxu0 %v256
    %913 = vmatprep.subr.mxu0 0.0
    %914 = vmatpush1.msra.mxu0 %v257
    %915 = vmatprep.subr.mxu0 0.0
    %916 = vmatpush1.msra.mxu0 %v258
    %917 = vmatprep.subr.mxu0 0.0
    %918 = vmatpush1.msra.mxu0 0.0
    %919 = vmatprep.subr.mxu0 0.0
    %920 = vmatpush1.msra.mxu0 0.0
    %921 = vmatprep.subr.mxu0 0.0
    %922 = vmatpush1.msra.mxu0 0.0
    %923 = vmatprep.subr.mxu0 0.0
    %924 = vmatpush1.msra.mxu0 0.0
    %925 = vmatprep.subr.mxu0 0.0
    %926 = vmatpush1.msra.mxu0 0.0
    %927 = vmatprep.subr.mxu0 0.0
    %928 = vmatpush1.msra.mxu0 0.0
    %929 = vmatprep.subr.mxu0 0.0
    %930 = vmatpush1.msra.mxu0 0.0
    %931 = vmatprep.subr.mxu0 0.0
    %932 = vmatpush1.msra.mxu0 0.0
    %933 = vmatprep.subr.mxu0 0.0
    %934 = vmatpush1.msra.mxu0 0.0
    %935 = vmatprep.subr.mxu0 0.0
    %936 = vmatpush1.msra.mxu0 0.0
    %937 = vmatprep.subr.mxu0 0.0
    %938 = vmatpush1.msra.mxu0 0.0
    %939 = vmatprep.subr.mxu0 0.0
    %940 = vmatpush1.msra.mxu0 0.0
    %941 = vmatprep.subr.mxu0 0.0
    %942 = vmatpush1.msra.mxu0 0.0
    %943 = vmatprep.subr.mxu0 0.0
    %944 = vmatpush1.msra.mxu0 0.0
    %945 = vmatprep.subr.mxu0 0.0
    %946 = vmatpush1.msra.mxu0 0.0
    %947 = vmatprep.subr.mxu0 0.0
    %948 = vmatpush1.msra.mxu0 0.0
    %949 = vmatprep.subr.mxu0 0.0
    %950 = vmatpush1.msra.mxu0 0.0
    %951 = vmatprep.subr.mxu0 0.0
    %952 = vmatpush1.msra.mxu0 0.0
    %953 = vmatprep.subr.mxu0 0.0
    %954 = vmatpush1.msra.mxu0 0.0
    %955 = vmatprep.subr.mxu0 0.0
    %956 = vmatpush1.msra.mxu0 0.0
    %957 = vmatprep.subr.mxu0 0.0
    %958 = vmatpush1.msra.mxu0 0.0
    %959 = vmatprep.subr.mxu0 0.0
    %960 = vmatpush1.msra.mxu0 0.0
    %961 = vmatprep.subr.mxu0 0.0
    %962 = vmatpush1.msra.mxu0 0.0
    %963 = vmatprep.subr.mxu0 0.0
    %964 = vmatpush1.msra.mxu0 0.0
    %965 = vmatprep.subr.mxu0 0.0
    %966 = vmatpush1.msra.mxu0 0.0
    %967 = vmatprep.subr.mxu0 0.0
    %968 = vmatpush1.msra.mxu0 0.0
    %969 = vmatprep.subr.mxu0 0.0
    %970 = vmatpush1.msra.mxu0 0.0
    %971 = vmatprep.subr.mxu0 0.0
    %972 = vmatpush1.msra.mxu0 0.0
    %973 = vmatprep.mubr.f32.mxu0 0.0
    %974 = vmatmul.mubr.f32.gmra.mrb[0].mxu0 %v907
    %v975 = vpop.f32.mrb[0].mxu0
    %v976 = vadd.f32 0.0, %v975
    %v977 = vpop.f32.mrb[0].mxu0
    %978 = vdwg.mxu0
    %v979 = vadd.f32 %v383, %v976
    %v980 = vxor.u32 %v979, 2147483648
    %v981 = vmul.f32 %v980, 1.442695
    %v982 = vpow.pop %v981
    %v983 = vadd.f32 %v982, 1.0
    %v984 = vrcp.pop %v983
    %v985 = vmul.f32 1.0, %v984
    %v986 = vtanh.pop %v979
    %v987 = vmul.f32 %v985, %v895
    %989 = vrot.lane.b32.xlu0 %v986, 64
    %v990 = vpop.permute.xlu0 %989
    %v992 = vmul.f32 %v985, %v990
    %994 = vrot.lane.b32.xlu0 %v992, 32
    %v995 = vpop.permute.xlu0 %994
    %v997 = vadd.f32 %v987, %v995
    %v998 = vtanh.pop %v997
    %1000 = vrot.lane.b32.xlu0 %v998, 64
    %v1001 = vpop.permute.xlu0 %1000
    %v1003 = vmul.f32 %v985, %v1001
    %1005 = vrot.lane.b32.xlu0 %v1003, 32
    %v1006 = vpop.permute.xlu0 %1005
    %1008 = vst.msk [vmem:[%s11 + $0x28] sm:$0xff] %vm266, %v1006
    %v1009 = vsel %vm266, %v1006, 0
    %1011 = vmatprep.subr.mxu0 0.0
    %1012 = vmatpush1.msra.mxu0 %v255
    %1013 = vmatprep.subr.mxu0 0.0
    %1014 = vmatpush1.msra.mxu0 %v256
    %1015 = vmatprep.subr.mxu0 0.0
    %1016 = vmatpush1.msra.mxu0 %v257
    %1017 = vmatprep.subr.mxu0 0.0
    %1018 = vmatpush1.msra.mxu0 %v258
    %1019 = vmatprep.subr.mxu0 0.0
    %1020 = vmatpush1.msra.mxu0 0.0
    %1021 = vmatprep.subr.mxu0 0.0
    %1022 = vmatpush1.msra.mxu0 0.0
    %1023 = vmatprep.subr.mxu0 0.0
    %1024 = vmatpush1.msra.mxu0 0.0
    %1025 = vmatprep.subr.mxu0 0.0
    %1026 = vmatpush1.msra.mxu0 0.0
    %1027 = vmatprep.subr.mxu0 0.0
    %1028 = vmatpush1.msra.mxu0 0.0
    %1029 = vmatprep.subr.mxu0 0.0
    %1030 = vmatpush1.msra.mxu0 0.0
    %1031 = vmatprep.subr.mxu0 0.0
    %1032 = vmatpush1.msra.mxu0 0.0
    %1033 = vmatprep.subr.mxu0 0.0
    %1034 = vmatpush1.msra.mxu0 0.0
    %1035 = vmatprep.subr.mxu0 0.0
    %1036 = vmatpush1.msra.mxu0 0.0
    %1037 = vmatprep.subr.mxu0 0.0
    %1038 = vmatpush1.msra.mxu0 0.0
    %1039 = vmatprep.subr.mxu0 0.0
    %1040 = vmatpush1.msra.mxu0 0.0
    %1041 = vmatprep.subr.mxu0 0.0
    %1042 = vmatpush1.msra.mxu0 0.0
    %1043 = vmatprep.subr.mxu0 0.0
    %1044 = vmatpush1.msra.mxu0 0.0
    %1045 = vmatprep.subr.mxu0 0.0
    %1046 = vmatpush1.msra.mxu0 0.0
    %1047 = vmatprep.subr.mxu0 0.0
    %1048 = vmatpush1.msra.mxu0 0.0
    %1049 = vmatprep.subr.mxu0 0.0
    %1050 = vmatpush1.msra.mxu0 0.0
    %1051 = vmatprep.subr.mxu0 0.0
    %1052 = vmatpush1.msra.mxu0 0.0
    %1053 = vmatprep.subr.mxu0 0.0
    %1054 = vmatpush1.msra.mxu0 0.0
    %1055 = vmatprep.subr.mxu0 0.0
    %1056 = vmatpush1.msra.mxu0 0.0
    %1057 = vmatprep.subr.mxu0 0.0
    %1058 = vmatpush1.msra.mxu0 0.0
    %1059 = vmatprep.subr.mxu0 0.0
    %1060 = vmatpush1.msra.mxu0 0.0
    %1061 = vmatprep.subr.mxu0 0.0
    %1062 = vmatpush1.msra.mxu0 0.0
    %1063 = vmatprep.subr.mxu0 0.0
    %1064 = vmatpush1.msra.mxu0 0.0
    %1065 = vmatprep.subr.mxu0 0.0
    %1066 = vmatpush1.msra.mxu0 0.0
    %1067 = vmatprep.subr.mxu0 0.0
    %1068 = vmatpush1.msra.mxu0 0.0
    %1069 = vmatprep.subr.mxu0 0.0
    %1070 = vmatpush1.msra.mxu0 0.0
    %1071 = vmatprep.subr.mxu0 0.0
    %1072 = vmatpush1.msra.mxu0 0.0
    %1073 = vmatprep.subr.mxu0 0.0
    %1074 = vmatpush1.msra.mxu0 0.0
    %1075 = vmatprep.mubr.f32.mxu0 0.0
    %1076 = vmatmul.mubr.f32.gmra.mrb[0].mxu0 %v1009
    %v1077 = vpop.f32.mrb[0].mxu0
    %v1078 = vadd.f32 0.0, %v1077
    %v1079 = vpop.f32.mrb[0].mxu0
    %1080 = vdwg.mxu0
    %v1081 = vadd.f32 %v388, %v1078
    %v1082 = vxor.u32 %v1081, 2147483648
    %v1083 = vmul.f32 %v1082, 1.442695
    %v1084 = vpow.pop %v1083
    %v1085 = vadd.f32 %v1084, 1.0
    %v1086 = vrcp.pop %v1085
    %v1087 = vmul.f32 1.0, %v1086
    %v1088 = vtanh.pop %v1081
    %v1089 = vmul.f32 %v1087, %v997
    %1091 = vrot.lane.b32.xlu0 %v1088, 64
    %v1092 = vpop.permute.xlu0 %1091
    %v1094 = vmul.f32 %v1087, %v1092
    %1096 = vrot.lane.b32.xlu0 %v1094, 32
    %v1097 = vpop.permute.xlu0 %1096
    %v1099 = vadd.f32 %v1089, %v1097
    %v1100 = vtanh.pop %v1099
    %1102 = vrot.lane.b32.xlu0 %v1100, 64
    %v1103 = vpop.permute.xlu0 %1102
    %v1105 = vmul.f32 %v1087, %v1103
    %1107 = vrot.lane.b32.xlu0 %v1105, 32
    %v1108 = vpop.permute.xlu0 %1107
    %1110 = vst.msk [vmem:[%s11 + $0x30] sm:$0xff] %vm266, %v1108
    %v1111 = vsel %vm266, %v1108, 0
    %1113 = vmatprep.subr.mxu0 0.0
    %1114 = vmatpush1.msra.mxu0 %v255
    %1115 = vmatprep.subr.mxu0 0.0
    %1116 = vmatpush1.msra.mxu0 %v256
    %1117 = vmatprep.subr.mxu0 0.0
    %1118 = vmatpush1.msra.mxu0 %v257
    %1119 = vmatprep.subr.mxu0 0.0
    %1120 = vmatpush1.msra.mxu0 %v258
    %1121 = vmatprep.subr.mxu0 0.0
    %1122 = vmatpush1.msra.mxu0 0.0
    %1123 = vmatprep.subr.mxu0 0.0
    %1124 = vmatpush1.msra.mxu0 0.0
    %1125 = vmatprep.subr.mxu0 0.0
    %1126 = vmatpush1.msra.mxu0 0.0
    %1127 = vmatprep.subr.mxu0 0.0
    %1128 = vmatpush1.msra.mxu0 0.0
    %1129 = vmatprep.subr.mxu0 0.0
    %1130 = vmatpush1.msra.mxu0 0.0
    %1131 = vmatprep.subr.mxu0 0.0
    %1132 = vmatpush1.msra.mxu0 0.0
    %1133 = vmatprep.subr.mxu0 0.0
    %1134 = vmatpush1.msra.mxu0 0.0
    %1135 = vmatprep.subr.mxu0 0.0
    %1136 = vmatpush1.msra.mxu0 0.0
    %1137 = vmatprep.subr.mxu0 0.0
    %1138 = vmatpush1.msra.mxu0 0.0
    %1139 = vmatprep.subr.mxu0 0.0
    %1140 = vmatpush1.msra.mxu0 0.0
    %1141 = vmatprep.subr.mxu0 0.0
    %1142 = vmatpush1.msra.mxu0 0.0
    %1143 = vmatprep.subr.mxu0 0.0
    %1144 = vmatpush1.msra.mxu0 0.0
    %1145 = vmatprep.subr.mxu0 0.0
    %1146 = vmatpush1.msra.mxu0 0.0
    %1147 = vmatprep.subr.mxu0 0.0
    %1148 = vmatpush1.msra.mxu0 0.0
    %1149 = vmatprep.subr.mxu0 0.0
    %1150 = vmatpush1.msra.mxu0 0.0
    %1151 = vmatprep.subr.mxu0 0.0
    %1152 = vmatpush1.msra.mxu0 0.0
    %1153 = vmatprep.subr.mxu0 0.0
    %1154 = vmatpush1.msra.mxu0 0.0
    %1155 = vmatprep.subr.mxu0 0.0
    %1156 = vmatpush1.msra.mxu0 0.0
    %1157 = vmatprep.subr.mxu0 0.0
    %1158 = vmatpush1.msra.mxu0 0.0
    %1159 = vmatprep.subr.mxu0 0.0
    %1160 = vmatpush1.msra.mxu0 0.0
    %1161 = vmatprep.subr.mxu0 0.0
    %1162 = vmatpush1.msra.mxu0 0.0
    %1163 = vmatprep.subr.mxu0 0.0
    %1164 = vmatpush1.msra.mxu0 0.0
    %1165 = vmatprep.subr.mxu0 0.0
    %1166 = vmatpush1.msra.mxu0 0.0
    %1167 = vmatprep.subr.mxu0 0.0
    %1168 = vmatpush1.msra.mxu0 0.0
    %1169 = vmatprep.subr.mxu0 0.0
    %1170 = vmatpush1.msra.mxu0 0.0
    %1171 = vmatprep.subr.mxu0 0.0
    %1172 = vmatpush1.msra.mxu0 0.0
    %1173 = vmatprep.subr.mxu0 0.0
    %1174 = vmatpush1.msra.mxu0 0.0
    %1175 = vmatprep.subr.mxu0 0.0
    %1176 = vmatpush1.msra.mxu0 0.0
    %1177 = vmatprep.mubr.f32.mxu0 0.0
    %1178 = vmatmul.mubr.f32.gmra.mrb[0].mxu0 %v1111
    %v1179 = vpop.f32.mrb[0].mxu0
    %v1180 = vadd.f32 0.0, %v1179
    %v1181 = vpop.f32.mrb[0].mxu0
    %1182 = vdwg.mxu0
    %v1183 = vadd.f32 %v393, %v1180
    %v1184 = vxor.u32 %v1183, 2147483648
    %v1185 = vmul.f32 %v1184, 1.442695
    %v1186 = vpow.pop %v1185
    %v1187 = vadd.f32 %v1186, 1.0
    %v1188 = vrcp.pop %v1187
    %v1189 = vmul.f32 1.0, %v1188
    %v1190 = vtanh.pop %v1183
    %v1191 = vmul.f32 %v1189, %v1099
    %1193 = vrot.lane.b32.xlu0 %v1190, 64
    %v1194 = vpop.permute.xlu0 %1193
    %v1196 = vmul.f32 %v1189, %v1194
    %1198 = vrot.lane.b32.xlu0 %v1196, 32
    %v1199 = vpop.permute.xlu0 %1198
    %v1201 = vadd.f32 %v1191, %v1199
    %v1202 = vtanh.pop %v1201
    %1204 = vrot.lane.b32.xlu0 %v1202, 64
    %v1205 = vpop.permute.xlu0 %1204
    %v1207 = vmul.f32 %v1189, %v1205
    %1209 = vrot.lane.b32.xlu0 %v1207, 32
    %v1210 = vpop.permute.xlu0 %1209
    %1212 = vst.msk [vmem:[%s11 + $0x38] sm:$0xff] %vm266, %v1210
    %1213 = vst.msk [vmem:[#allocation6] sm:$0xff] %vm266, %v1210
    %1215 = vrot.lane.b32.xlu0 %v1201, 96
    %v1216 = vpop.permute.xlu0 %1215
    %1218 = vst.msk [vmem:[#allocation8] sm:$0xff] %vm266, %v1216
    %v1219 = vld [vmem:[%s11] sm:$0xff]
    %v1220 = vld [vmem:[%s11 + $0x8] sm:$0xff]
    %v1221 = vld [vmem:[%s11 + $0x10] sm:$0xff]
    %v1222 = vld [vmem:[%s11 + $0x18] sm:$0xff]
    %v1223 = vld [vmem:[%s11 + $0x20] sm:$0xff]
    %v1224 = vld [vmem:[%s11 + $0x28] sm:$0xff]
    %v1225 = vld [vmem:[%s11 + $0x30] sm:$0xff]
    %v1226 = vld [vmem:[%s11 + $0x38] sm:$0xff]
    %v1227 = vld [vmem:[%s5] sm:$0xff]
    %v1228 = vld [vmem:[%s5 + $0x8] sm:$0xff]
    %v1229 = vld [vmem:[%s5 + $0x10] sm:$0xff]
    %v1230 = vld [vmem:[%s5 + $0x18] sm:$0xff]
    %v1231 = vld [vmem:[%s6] sm:$0xff]
    %v1232 = vld [vmem:[%s6 + $0x8] sm:$0xff]
    %v1233 = vld [vmem:[%s6 + $0x10] sm:$0xff]
    %v1234 = vld [vmem:[%s6 + $0x18] sm:$0xff]
    %v1235 = vld [vmem:[%s7] sm:$0x1]
    %v1237 = vlaneseq
    %v1238 = vshrl.u32 %v1237, 7
    %v1239 = vsub.s32 0, %v1238
    %v1240 = vrot.slane %v1235, %v1239
    %v1243 = vsel %vm266, %v1219, 0
    %v1246 = vsel %vm266, %v1220, 0
    %v1249 = vsel %vm266, %v1221, 0
    %v1252 = vsel %vm266, %v1222, 0
    %v1255 = vsel %vm266, %v1223, 0
    %v1258 = vsel %vm266, %v1224, 0
    %v1261 = vsel %vm266, %v1225, 0
    %v1264 = vsel %vm266, %v1226, 0
    %1266 = vmatprep.subr.mxu0 0.0
    %1267 = vmatpush1.msra.mxu0 %v1227
    %1268 = vmatprep.subr.mxu0 0.0
    %1269 = vmatpush1.msra.mxu0 %v1228
    %1270 = vmatprep.subr.mxu0 0.0
    %1271 = vmatpush1.msra.mxu0 %v1229
    %1272 = vmatprep.subr.mxu0 0.0
    %1273 = vmatpush1.msra.mxu0 %v1230
    %1274 = vmatprep.subr.mxu0 0.0
    %1275 = vmatpush1.msra.mxu0 0.0
    %1276 = vmatprep.subr.mxu0 0.0
    %1277 = vmatpush1.msra.mxu0 0.0
    %1278 = vmatprep.subr.mxu0 0.0
    %1279 = vmatpush1.msra.mxu0 0.0
    %1280 = vmatprep.subr.mxu0 0.0
    %1281 = vmatpush1.msra.mxu0 0.0
    %1282 = vmatprep.subr.mxu0 0.0
    %1283 = vmatpush1.msra.mxu0 0.0
    %1284 = vmatprep.subr.mxu0 0.0
    %1285 = vmatpush1.msra.mxu0 0.0
    %1286 = vmatprep.subr.mxu0 0.0
    %1287 = vmatpush1.msra.mxu0 0.0
    %1288 = vmatprep.subr.mxu0 0.0
    %1289 = vmatpush1.msra.mxu0 0.0
    %1290 = vmatprep.subr.mxu0 0.0
    %1291 = vmatpush1.msra.mxu0 0.0
    %1292 = vmatprep.subr.mxu0 0.0
    %1293 = vmatpush1.msra.mxu0 0.0
    %1294 = vmatprep.subr.mxu0 0.0
    %1295 = vmatpush1.msra.mxu0 0.0
    %1296 = vmatprep.subr.mxu0 0.0
    %1297 = vmatpush1.msra.mxu0 0.0
    %1298 = vmatprep.subr.mxu0 0.0
    %1299 = vmatpush1.msra.mxu0 0.0
    %1300 = vmatprep.subr.mxu0 0.0
    %1301 = vmatpush1.msra.mxu0 0.0
    %1302 = vmatprep.subr.mxu0 0.0
    %1303 = vmatpush1.msra.mxu0 0.0
    %1304 = vmatprep.subr.mxu0 0.0
    %1305 = vmatpush1.msra.mxu0 0.0
    %1306 = vmatprep.subr.mxu0 0.0
    %1307 = vmatpush1.msra.mxu0 0.0
    %1308 = vmatprep.subr.mxu0 0.0
    %1309 = vmatpush1.msra.mxu0 0.0
    %1310 = vmatprep.subr.mxu0 0.0
    %1311 = vmatpush1.msra.mxu0 0.0
    %1312 = vmatprep.subr.mxu0 0.0
    %1313 = vmatpush1.msra.mxu0 0.0
    %1314 = vmatprep.subr.mxu0 0.0
    %1315 = vmatpush1.msra.mxu0 0.0
    %1316 = vmatprep.subr.mxu0 0.0
    %1317 = vmatpush1.msra.mxu0 0.0
    %1318 = vmatprep.subr.mxu0 0.0
    %1319 = vmatpush1.msra.mxu0 0.0
    %1320 = vmatprep.subr.mxu0 0.0
    %1321 = vmatpush1.msra.mxu0 0.0
    %1322 = vmatprep.subr.mxu0 0.0
    %1323 = vmatpush1.msra.mxu0 0.0
    %1324 = vmatprep.subr.mxu0 0.0
    %1325 = vmatpush1.msra.mxu0 0.0
    %1326 = vmatprep.subr.mxu0 0.0
    %1327 = vmatpush1.msra.mxu0 0.0
    %1328 = vmatprep.subr.mxu0 0.0
    %1329 = vmatpush1.msra.mxu0 0.0
    %1330 = vmatprep.mubr.f32.mxu0 0.0
    %1331 = vmatmul.mubr.f32.gmra.mrb[0].mxu0 %v1243
    %v1332 = vpop.f32.mrb[0].mxu0
    %v1333 = vadd.f32 %v1240, %v1332
    %v1334 = vpop.f32.mrb[0].mxu0
    %1335 = vmatprep.mubr.f32.mxu0 0.0
    %1336 = vmatmul.mubr.f32.gmra.mrb[0].mxu0 %v1246
    %v1337 = vpop.f32.mrb[0].mxu0
    %v1338 = vadd.f32 %v1240, %v1337
    %v1339 = vpop.f32.mrb[0].mxu0
    %1340 = vmatprep.mubr.f32.mxu0 0.0
    %1341 = vmatmul.mubr.f32.gmra.mrb[0].mxu0 %v1249
    %v1342 = vpop.f32.mrb[0].mxu0
    %v1343 = vadd.f32 %v1240, %v1342
    %v1344 = vpop.f32.mrb[0].mxu0
    %1345 = vmatprep.mubr.f32.mxu0 0.0
    %1346 = vmatmul.mubr.f32.gmra.mrb[0].mxu0 %v1252
    %v1347 = vpop.f32.mrb[0].mxu0
    %v1348 = vadd.f32 %v1240, %v1347
    %v1349 = vpop.f32.mrb[0].mxu0
    %1350 = vmatprep.mubr.f32.mxu0 0.0
    %1351 = vmatmul.mubr.f32.gmra.mrb[0].mxu0 %v1255
    %v1352 = vpop.f32.mrb[0].mxu0
    %v1353 = vadd.f32 %v1240, %v1352
    %v1354 = vpop.f32.mrb[0].mxu0
    %1355 = vmatprep.mubr.f32.mxu0 0.0
    %1356 = vmatmul.mubr.f32.gmra.mrb[0].mxu0 %v1258
    %v1357 = vpop.f32.mrb[0].mxu0
    %v1358 = vadd.f32 %v1240, %v1357
    %v1359 = vpop.f32.mrb[0].mxu0
    %1360 = vmatprep.mubr.f32.mxu0 0.0
    %1361 = vmatmul.mubr.f32.gmra.mrb[0].mxu0 %v1261
    %v1362 = vpop.f32.mrb[0].mxu0
    %v1363 = vadd.f32 %v1240, %v1362
    %v1364 = vpop.f32.mrb[0].mxu0
    %1365 = vmatprep.mubr.f32.mxu0 0.0
    %1366 = vmatmul.mubr.f32.gmra.mrb[0].mxu0 %v1264
    %v1367 = vpop.f32.mrb[0].mxu0
    %v1368 = vadd.f32 %v1240, %v1367
    %v1369 = vpop.f32.mrb[0].mxu0
    %1370 = vdwg.mxu0
    %1371 = vmatprep.subr.mxu0 0.0
    %1372 = vmatpush1.msra.mxu0 %v1231
    %1373 = vmatprep.subr.mxu0 0.0
    %1374 = vmatpush1.msra.mxu0 %v1232
    %1375 = vmatprep.subr.mxu0 0.0
    %1376 = vmatpush1.msra.mxu0 %v1233
    %1377 = vmatprep.subr.mxu0 0.0
    %1378 = vmatpush1.msra.mxu0 %v1234
    %1379 = vmatprep.subr.mxu0 0.0
    %1380 = vmatpush1.msra.mxu0 0.0
    %1381 = vmatprep.subr.mxu0 0.0
    %1382 = vmatpush1.msra.mxu0 0.0
    %1383 = vmatprep.subr.mxu0 0.0
    %1384 = vmatpush1.msra.mxu0 0.0
    %1385 = vmatprep.subr.mxu0 0.0
    %1386 = vmatpush1.msra.mxu0 0.0
    %1387 = vmatprep.subr.mxu0 0.0
    %1388 = vmatpush1.msra.mxu0 0.0
    %1389 = vmatprep.subr.mxu0 0.0
    %1390 = vmatpush1.msra.mxu0 0.0
    %1391 = vmatprep.subr.mxu0 0.0
    %1392 = vmatpush1.msra.mxu0 0.0
    %1393 = vmatprep.subr.mxu0 0.0
    %1394 = vmatpush1.msra.mxu0 0.0
    %1395 = vmatprep.subr.mxu0 0.0
    %1396 = vmatpush1.msra.mxu0 0.0
    %1397 = vmatprep.subr.mxu0 0.0
    %1398 = vmatpush1.msra.mxu0 0.0
    %1399 = vmatprep.subr.mxu0 0.0
    %1400 = vmatpush1.msra.mxu0 0.0
    %1401 = vmatprep.subr.mxu0 0.0
    %1402 = vmatpush1.msra.mxu0 0.0
    %1403 = vmatprep.subr.mxu0 0.0
    %1404 = vmatpush1.msra.mxu0 0.0
    %1405 = vmatprep.subr.mxu0 0.0
    %1406 = vmatpush1.msra.mxu0 0.0
    %1407 = vmatprep.subr.mxu0 0.0
    %1408 = vmatpush1.msra.mxu0 0.0
    %1409 = vmatprep.subr.mxu0 0.0
    %1410 = vmatpush1.msra.mxu0 0.0
    %1411 = vmatprep.subr.mxu0 0.0
    %1412 = vmatpush1.msra.mxu0 0.0
    %1413 = vmatprep.subr.mxu0 0.0
    %1414 = vmatpush1.msra.mxu0 0.0
    %1415 = vmatprep.subr.mxu0 0.0
    %1416 = vmatpush1.msra.mxu0 0.0
    %1417 = vmatprep.subr.mxu0 0.0
    %1418 = vmatpush1.msra.mxu0 0.0
    %1419 = vmatprep.subr.mxu0 0.0
    %1420 = vmatpush1.msra.mxu0 0.0
    %1421 = vmatprep.subr.mxu0 0.0
    %1422 = vmatpush1.msra.mxu0 0.0
    %1423 = vmatprep.subr.mxu0 0.0
    %1424 = vmatpush1.msra.mxu0 0.0
    %1425 = vmatprep.subr.mxu0 0.0
    %1426 = vmatpush1.msra.mxu0 0.0
    %1427 = vmatprep.subr.mxu0 0.0
    %1428 = vmatpush1.msra.mxu0 0.0
    %1429 = vmatprep.subr.mxu0 0.0
    %1430 = vmatpush1.msra.mxu0 0.0
    %1431 = vmatprep.subr.mxu0 0.0
    %1432 = vmatpush1.msra.mxu0 0.0
    %1433 = vmatprep.subr.mxu0 0.0
    %1434 = vmatpush1.msra.mxu0 0.0
    %1435 = vmatprep.mubr.f32.mxu0 0.0
    %1436 = vmatmul.mubr.f32.gmra.mrb[0].mxu0 %v397
    %v1437 = vpop.f32.mrb[0].mxu0
    %v1438 = vadd.f32 0.0, %v1437
    %v1439 = vpop.f32.mrb[0].mxu0
    %1440 = vdwg.mxu0
    %v1441 = vadd.f32 %v1333, %v1438
    %v1442 = vxor.u32 %v1441, 2147483648
    %v1443 = vmul.f32 %v1442, 1.442695
    %v1444 = vpow.pop %v1443
    %v1445 = vadd.f32 %v1444, 1.0
    %v1446 = vrcp.pop %v1445
    %v1447 = vmul.f32 1.0, %v1446
    %v1448 = vtanh.pop %v1441
    %v1449 = vmul.f32 %v1447, 0.0
    %1451 = vrot.lane.b32.xlu0 %v1448, 64
    %v1452 = vpop.permute.xlu0 %1451
    %v1454 = vmul.f32 %v1447, %v1452
    %1456 = vrot.lane.b32.xlu0 %v1454, 32
    %v1457 = vpop.permute.xlu0 %1456
    %v1459 = vadd.f32 %v1449, %v1457
    %v1460 = vtanh.pop %v1459
    %1462 = vrot.lane.b32.xlu0 %v1460, 64
    %v1463 = vpop.permute.xlu0 %1462
    %v1465 = vmul.f32 %v1447, %v1463
    %1467 = vrot.lane.b32.xlu0 %v1465, 32
    %v1468 = vpop.permute.xlu0 %1467
    %1470 = vst.msk [vmem:[%s11] sm:$0xff] %vm266, %v1468
    %v1471 = vsel %vm266, %v1468, 0
    %1473 = vmatprep.subr.mxu0 0.0
    %1474 = vmatpush1.msra.mxu0 %v1231
    %1475 = vmatprep.subr.mxu0 0.0
    %1476 = vmatpush1.msra.mxu0 %v1232
    %1477 = vmatprep.subr.mxu0 0.0
    %1478 = vmatpush1.msra.mxu0 %v1233
    %1479 = vmatprep.subr.mxu0 0.0
    %1480 = vmatpush1.msra.mxu0 %v1234
    %1481 = vmatprep.subr.mxu0 0.0
    %1482 = vmatpush1.msra.mxu0 0.0
    %1483 = vmatprep.subr.mxu0 0.0
    %1484 = vmatpush1.msra.mxu0 0.0
    %1485 = vmatprep.subr.mxu0 0.0
    %1486 = vmatpush1.msra.mxu0 0.0
    %1487 = vmatprep.subr.mxu0 0.0
    %1488 = vmatpush1.msra.mxu0 0.0
    %1489 = vmatprep.subr.mxu0 0.0
    %1490 = vmatpush1.msra.mxu0 0.0
    %1491 = vmatprep.subr.mxu0 0.0
    %1492 = vmatpush1.msra.mxu0 0.0
    %1493 = vmatprep.subr.mxu0 0.0
    %1494 = vmatpush1.msra.mxu0 0.0
    %1495 = vmatprep.subr.mxu0 0.0
    %1496 = vmatpush1.msra.mxu0 0.0
    %1497 = vmatprep.subr.mxu0 0.0
    %1498 = vmatpush1.msra.mxu0 0.0
    %1499 = vmatprep.subr.mxu0 0.0
    %1500 = vmatpush1.msra.mxu0 0.0
    %1501 = vmatprep.subr.mxu0 0.0
    %1502 = vmatpush1.msra.mxu0 0.0
    %1503 = vmatprep.subr.mxu0 0.0
    %1504 = vmatpush1.msra.mxu0 0.0
    %1505 = vmatprep.subr.mxu0 0.0
    %1506 = vmatpush1.msra.mxu0 0.0
    %1507 = vmatprep.subr.mxu0 0.0
    %1508 = vmatpush1.msra.mxu0 0.0
    %1509 = vmatprep.subr.mxu0 0.0
    %1510 = vmatpush1.msra.mxu0 0.0
    %1511 = vmatprep.subr.mxu0 0.0
    %1512 = vmatpush1.msra.mxu0 0.0
    %1513 = vmatprep.subr.mxu0 0.0
    %1514 = vmatpush1.msra.mxu0 0.0
    %1515 = vmatprep.subr.mxu0 0.0
    %1516 = vmatpush1.msra.mxu0 0.0
    %1517 = vmatprep.subr.mxu0 0.0
    %1518 = vmatpush1.msra.mxu0 0.0
    %1519 = vmatprep.subr.mxu0 0.0
    %1520 = vmatpush1.msra.mxu0 0.0
    %1521 = vmatprep.subr.mxu0 0.0
    %1522 = vmatpush1.msra.mxu0 0.0
    %1523 = vmatprep.subr.mxu0 0.0
    %1524 = vmatpush1.msra.mxu0 0.0
    %1525 = vmatprep.subr.mxu0 0.0
    %1526 = vmatpush1.msra.mxu0 0.0
    %1527 = vmatprep.subr.mxu0 0.0
    %1528 = vmatpush1.msra.mxu0 0.0
    %1529 = vmatprep.subr.mxu0 0.0
    %1530 = vmatpush1.msra.mxu0 0.0
    %1531 = vmatprep.subr.mxu0 0.0
    %1532 = vmatpush1.msra.mxu0 0.0
    %1533 = vmatprep.subr.mxu0 0.0
    %1534 = vmatpush1.msra.mxu0 0.0
    %1535 = vmatprep.subr.mxu0 0.0
    %1536 = vmatpush1.msra.mxu0 0.0
    %1537 = vmatprep.mubr.f32.mxu0 0.0
    %1538 = vmatmul.mubr.f32.gmra.mrb[0].mxu0 %v1471
    %v1539 = vpop.f32.mrb[0].mxu0
    %v1540 = vadd.f32 0.0, %v1539
    %v1541 = vpop.f32.mrb[0].mxu0
    %1542 = vdwg.mxu0
    %v1543 = vadd.f32 %v1338, %v1540
    %v1544 = vxor.u32 %v1543, 2147483648
    %v1545 = vmul.f32 %v1544, 1.442695
    %v1546 = vpow.pop %v1545
    %v1547 = vadd.f32 %v1546, 1.0
    %v1548 = vrcp.pop %v1547
    %v1549 = vmul.f32 1.0, %v1548
    %v1550 = vtanh.pop %v1543
    %v1551 = vmul.f32 %v1549, %v1459
    %1553 = vrot.lane.b32.xlu0 %v1550, 64
    %v1554 = vpop.permute.xlu0 %1553
    %v1556 = vmul.f32 %v1549, %v1554
    %1558 = vrot.lane.b32.xlu0 %v1556, 32
    %v1559 = vpop.permute.xlu0 %1558
    %v1561 = vadd.f32 %v1551, %v1559
    %v1562 = vtanh.pop %v1561
    %1564 = vrot.lane.b32.xlu0 %v1562, 64
    %v1565 = vpop.permute.xlu0 %1564
    %v1567 = vmul.f32 %v1549, %v1565
    %1569 = vrot.lane.b32.xlu0 %v1567, 32
    %v1570 = vpop.permute.xlu0 %1569
    %1572 = vst.msk [vmem:[%s11 + $0x8] sm:$0xff] %vm266, %v1570
    %v1573 = vsel %vm266, %v1570, 0
    %1575 = vmatprep.subr.mxu0 0.0
    %1576 = vmatpush1.msra.mxu0 %v1231
    %1577 = vmatprep.subr.mxu0 0.0
    %1578 = vmatpush1.msra.mxu0 %v1232
    %1579 = vmatprep.subr.mxu0 0.0
    %1580 = vmatpush1.msra.mxu0 %v1233
    %1581 = vmatprep.subr.mxu0 0.0
    %1582 = vmatpush1.msra.mxu0 %v1234
    %1583 = vmatprep.subr.mxu0 0.0
    %1584 = vmatpush1.msra.mxu0 0.0
    %1585 = vmatprep.subr.mxu0 0.0
    %1586 = vmatpush1.msra.mxu0 0.0
    %1587 = vmatprep.subr.mxu0 0.0
    %1588 = vmatpush1.msra.mxu0 0.0
    %1589 = vmatprep.subr.mxu0 0.0
    %1590 = vmatpush1.msra.mxu0 0.0
    %1591 = vmatprep.subr.mxu0 0.0
    %1592 = vmatpush1.msra.mxu0 0.0
    %1593 = vmatprep.subr.mxu0 0.0
    %1594 = vmatpush1.msra.mxu0 0.0
    %1595 = vmatprep.subr.mxu0 0.0
    %1596 = vmatpush1.msra.mxu0 0.0
    %1597 = vmatprep.subr.mxu0 0.0
    %1598 = vmatpush1.msra.mxu0 0.0
    %1599 = vmatprep.subr.mxu0 0.0
    %1600 = vmatpush1.msra.mxu0 0.0
    %1601 = vmatprep.subr.mxu0 0.0
    %1602 = vmatpush1.msra.mxu0 0.0
    %1603 = vmatprep.subr.mxu0 0.0
    %1604 = vmatpush1.msra.mxu0 0.0
    %1605 = vmatprep.subr.mxu0 0.0
    %1606 = vmatpush1.msra.mxu0 0.0
    %1607 = vmatprep.subr.mxu0 0.0
    %1608 = vmatpush1.msra.mxu0 0.0
    %1609 = vmatprep.subr.mxu0 0.0
    %1610 = vmatpush1.msra.mxu0 0.0
    %1611 = vmatprep.subr.mxu0 0.0
    %1612 = vmatpush1.msra.mxu0 0.0
    %1613 = vmatprep.subr.mxu0 0.0
    %1614 = vmatpush1.msra.mxu0 0.0
    %1615 = vmatprep.subr.mxu0 0.0
    %1616 = vmatpush1.msra.mxu0 0.0
    %1617 = vmatprep.subr.mxu0 0.0
    %1618 = vmatpush1.msra.mxu0 0.0
    %1619 = vmatprep.subr.mxu0 0.0
    %1620 = vmatpush1.msra.mxu0 0.0
    %1621 = vmatprep.subr.mxu0 0.0
    %1622 = vmatpush1.msra.mxu0 0.0
    %1623 = vmatprep.subr.mxu0 0.0
    %1624 = vmatpush1.msra.mxu0 0.0
    %1625 = vmatprep.subr.mxu0 0.0
    %1626 = vmatpush1.msra.mxu0 0.0
    %1627 = vmatprep.subr.mxu0 0.0
    %1628 = vmatpush1.msra.mxu0 0.0
    %1629 = vmatprep.subr.mxu0 0.0
    %1630 = vmatpush1.msra.mxu0 0.0
    %1631 = vmatprep.subr.mxu0 0.0
    %1632 = vmatpush1.msra.mxu0 0.0
    %1633 = vmatprep.subr.mxu0 0.0
    %1634 = vmatpush1.msra.mxu0 0.0
    %1635 = vmatprep.subr.mxu0 0.0
    %1636 = vmatpush1.msra.mxu0 0.0
    %1637 = vmatprep.subr.mxu0 0.0
    %1638 = vmatpush1.msra.mxu0 0.0
    %1639 = vmatprep.mubr.f32.mxu0 0.0
    %1640 = vmatmul.mubr.f32.gmra.mrb[0].mxu0 %v1573
    %v1641 = vpop.f32.mrb[0].mxu0
    %v1642 = vadd.f32 0.0, %v1641
    %v1643 = vpop.f32.mrb[0].mxu0
    %1644 = vdwg.mxu0
    %v1645 = vadd.f32 %v1343, %v1642
    %v1646 = vxor.u32 %v1645, 2147483648
    %v1647 = vmul.f32 %v1646, 1.442695
    %v1648 = vpow.pop %v1647
    %v1649 = vadd.f32 %v1648, 1.0
    %v1650 = vrcp.pop %v1649
    %v1651 = vmul.f32 1.0, %v1650
    %v1652 = vtanh.pop %v1645
    %v1653 = vmul.f32 %v1651, %v1561
    %1655 = vrot.lane.b32.xlu0 %v1652, 64
    %v1656 = vpop.permute.xlu0 %1655
    %v1658 = vmul.f32 %v1651, %v1656
    %1660 = vrot.lane.b32.xlu0 %v1658, 32
    %v1661 = vpop.permute.xlu0 %1660
    %v1663 = vadd.f32 %v1653, %v1661
    %v1664 = vtanh.pop %v1663
    %1666 = vrot.lane.b32.xlu0 %v1664, 64
    %v1667 = vpop.permute.xlu0 %1666
    %v1669 = vmul.f32 %v1651, %v1667
    %1671 = vrot.lane.b32.xlu0 %v1669, 32
    %v1672 = vpop.permute.xlu0 %1671
    %1674 = vst.msk [vmem:[%s11 + $0x10] sm:$0xff] %vm266, %v1672
    %v1675 = vsel %vm266, %v1672, 0
    %1677 = vmatprep.subr.mxu0 0.0
    %1678 = vmatpush1.msra.mxu0 %v1231
    %1679 = vmatprep.subr.mxu0 0.0
    %1680 = vmatpush1.msra.mxu0 %v1232
    %1681 = vmatprep.subr.mxu0 0.0
    %1682 = vmatpush1.msra.mxu0 %v1233
    %1683 = vmatprep.subr.mxu0 0.0
    %1684 = vmatpush1.msra.mxu0 %v1234
    %1685 = vmatprep.subr.mxu0 0.0
    %1686 = vmatpush1.msra.mxu0 0.0
    %1687 = vmatprep.subr.mxu0 0.0
    %1688 = vmatpush1.msra.mxu0 0.0
    %1689 = vmatprep.subr.mxu0 0.0
    %1690 = vmatpush1.msra.mxu0 0.0
    %1691 = vmatprep.subr.mxu0 0.0
    %1692 = vmatpush1.msra.mxu0 0.0
    %1693 = vmatprep.subr.mxu0 0.0
    %1694 = vmatpush1.msra.mxu0 0.0
    %1695 = vmatprep.subr.mxu0 0.0
    %1696 = vmatpush1.msra.mxu0 0.0
    %1697 = vmatprep.subr.mxu0 0.0
    %1698 = vmatpush1.msra.mxu0 0.0
    %1699 = vmatprep.subr.mxu0 0.0
    %1700 = vmatpush1.msra.mxu0 0.0
    %1701 = vmatprep.subr.mxu0 0.0
    %1702 = vmatpush1.msra.mxu0 0.0
    %1703 = vmatprep.subr.mxu0 0.0
    %1704 = vmatpush1.msra.mxu0 0.0
    %1705 = vmatprep.subr.mxu0 0.0
    %1706 = vmatpush1.msra.mxu0 0.0
    %1707 = vmatprep.subr.mxu0 0.0
    %1708 = vmatpush1.msra.mxu0 0.0
    %1709 = vmatprep.subr.mxu0 0.0
    %1710 = vmatpush1.msra.mxu0 0.0
    %1711 = vmatprep.subr.mxu0 0.0
    %1712 = vmatpush1.msra.mxu0 0.0
    %1713 = vmatprep.subr.mxu0 0.0
    %1714 = vmatpush1.msra.mxu0 0.0
    %1715 = vmatprep.subr.mxu0 0.0
    %1716 = vmatpush1.msra.mxu0 0.0
    %1717 = vmatprep.subr.mxu0 0.0
    %1718 = vmatpush1.msra.mxu0 0.0
    %1719 = vmatprep.subr.mxu0 0.0
    %1720 = vmatpush1.msra.mxu0 0.0
    %1721 = vmatprep.subr.mxu0 0.0
    %1722 = vmatpush1.msra.mxu0 0.0
    %1723 = vmatprep.subr.mxu0 0.0
    %1724 = vmatpush1.msra.mxu0 0.0
    %1725 = vmatprep.subr.mxu0 0.0
    %1726 = vmatpush1.msra.mxu0 0.0
    %1727 = vmatprep.subr.mxu0 0.0
    %1728 = vmatpush1.msra.mxu0 0.0
    %1729 = vmatprep.subr.mxu0 0.0
    %1730 = vmatpush1.msra.mxu0 0.0
    %1731 = vmatprep.subr.mxu0 0.0
    %1732 = vmatpush1.msra.mxu0 0.0
    %1733 = vmatprep.subr.mxu0 0.0
    %1734 = vmatpush1.msra.mxu0 0.0
    %1735 = vmatprep.subr.mxu0 0.0
    %1736 = vmatpush1.msra.mxu0 0.0
    %1737 = vmatprep.subr.mxu0 0.0
    %1738 = vmatpush1.msra.mxu0 0.0
    %1739 = vmatprep.subr.mxu0 0.0
    %1740 = vmatpush1.msra.mxu0 0.0
    %1741 = vmatprep.mubr.f32.mxu0 0.0
    %1742 = vmatmul.mubr.f32.gmra.mrb[0].mxu0 %v1675
    %v1743 = vpop.f32.mrb[0].mxu0
    %v1744 = vadd.f32 0.0, %v1743
    %v1745 = vpop.f32.mrb[0].mxu0
    %1746 = vdwg.mxu0
    %v1747 = vadd.f32 %v1348, %v1744
    %v1748 = vxor.u32 %v1747, 2147483648
    %v1749 = vmul.f32 %v1748, 1.442695
    %v1750 = vpow.pop %v1749
    %v1751 = vadd.f32 %v1750, 1.0
    %v1752 = vrcp.pop %v1751
    %v1753 = vmul.f32 1.0, %v1752
    %v1754 = vtanh.pop %v1747
    %v1755 = vmul.f32 %v1753, %v1663
    %1757 = vrot.lane.b32.xlu0 %v1754, 64
    %v1758 = vpop.permute.xlu0 %1757
    %v1760 = vmul.f32 %v1753, %v1758
    %1762 = vrot.lane.b32.xlu0 %v1760, 32
    %v1763 = vpop.permute.xlu0 %1762
    %v1765 = vadd.f32 %v1755, %v1763
    %v1766 = vtanh.pop %v1765
    %1768 = vrot.lane.b32.xlu0 %v1766, 64
    %v1769 = vpop.permute.xlu0 %1768
    %v1771 = vmul.f32 %v1753, %v1769
    %1773 = vrot.lane.b32.xlu0 %v1771, 32
    %v1774 = vpop.permute.xlu0 %1773
    %1776 = vst.msk [vmem:[%s11 + $0x18] sm:$0xff] %vm266, %v1774
    %v1777 = vsel %vm266, %v1774, 0
    %1779 = vmatprep.subr.mxu0 0.0
    %1780 = vmatpush1.msra.mxu0 %v1231
    %1781 = vmatprep.subr.mxu0 0.0
    %1782 = vmatpush1.msra.mxu0 %v1232
    %1783 = vmatprep.subr.mxu0 0.0
    %1784 = vmatpush1.msra.mxu0 %v1233
    %1785 = vmatprep.subr.mxu0 0.0
    %1786 = vmatpush1.msra.mxu0 %v1234
    %1787 = vmatprep.subr.mxu0 0.0
    %1788 = vmatpush1.msra.mxu0 0.0
    %1789 = vmatprep.subr.mxu0 0.0
    %1790 = vmatpush1.msra.mxu0 0.0
    %1791 = vmatprep.subr.mxu0 0.0
    %1792 = vmatpush1.msra.mxu0 0.0
    %1793 = vmatprep.subr.mxu0 0.0
    %1794 = vmatpush1.msra.mxu0 0.0
    %1795 = vmatprep.subr.mxu0 0.0
    %1796 = vmatpush1.msra.mxu0 0.0
    %1797 = vmatprep.subr.mxu0 0.0
    %1798 = vmatpush1.msra.mxu0 0.0
    %1799 = vmatprep.subr.mxu0 0.0
    %1800 = vmatpush1.msra.mxu0 0.0
    %1801 = vmatprep.subr.mxu0 0.0
    %1802 = vmatpush1.msra.mxu0 0.0
    %1803 = vmatprep.subr.mxu0 0.0
    %1804 = vmatpush1.msra.mxu0 0.0
    %1805 = vmatprep.subr.mxu0 0.0
    %1806 = vmatpush1.msra.mxu0 0.0
    %1807 = vmatprep.subr.mxu0 0.0
    %1808 = vmatpush1.msra.mxu0 0.0
    %1809 = vmatprep.subr.mxu0 0.0
    %1810 = vmatpush1.msra.mxu0 0.0
    %1811 = vmatprep.subr.mxu0 0.0
    %1812 = vmatpush1.msra.mxu0 0.0
    %1813 = vmatprep.subr.mxu0 0.0
    %1814 = vmatpush1.msra.mxu0 0.0
    %1815 = vmatprep.subr.mxu0 0.0
    %1816 = vmatpush1.msra.mxu0 0.0
    %1817 = vmatprep.subr.mxu0 0.0
    %1818 = vmatpush1.msra.mxu0 0.0
    %1819 = vmatprep.subr.mxu0 0.0
    %1820 = vmatpush1.msra.mxu0 0.0
    %1821 = vmatprep.subr.mxu0 0.0
    %1822 = vmatpush1.msra.mxu0 0.0
    %1823 = vmatprep.subr.mxu0 0.0
    %1824 = vmatpush1.msra.mxu0 0.0
    %1825 = vmatprep.subr.mxu0 0.0
    %1826 = vmatpush1.msra.mxu0 0.0
    %1827 = vmatprep.subr.mxu0 0.0
    %1828 = vmatpush1.msra.mxu0 0.0
    %1829 = vmatprep.subr.mxu0 0.0
    %1830 = vmatpush1.msra.mxu0 0.0
    %1831 = vmatprep.subr.mxu0 0.0
    %1832 = vmatpush1.msra.mxu0 0.0
    %1833 = vmatprep.subr.mxu0 0.0
    %1834 = vmatpush1.msra.mxu0 0.0
    %1835 = vmatprep.subr.mxu0 0.0
    %1836 = vmatpush1.msra.mxu0 0.0
    %1837 = vmatprep.subr.mxu0 0.0
    %1838 = vmatpush1.msra.mxu0 0.0
    %1839 = vmatprep.subr.mxu0 0.0
    %1840 = vmatpush1.msra.mxu0 0.0
    %1841 = vmatprep.subr.mxu0 0.0
    %1842 = vmatpush1.msra.mxu0 0.0
    %1843 = vmatprep.mubr.f32.mxu0 0.0
    %1844 = vmatmul.mubr.f32.gmra.mrb[0].mxu0 %v1777
    %v1845 = vpop.f32.mrb[0].mxu0
    %v1846 = vadd.f32 0.0, %v1845
    %v1847 = vpop.f32.mrb[0].mxu0
    %1848 = vdwg.mxu0
    %v1849 = vadd.f32 %v1353, %v1846
    %v1850 = vxor.u32 %v1849, 2147483648
    %v1851 = vmul.f32 %v1850, 1.442695
    %v1852 = vpow.pop %v1851
    %v1853 = vadd.f32 %v1852, 1.0
    %v1854 = vrcp.pop %v1853
    %v1855 = vmul.f32 1.0, %v1854
    %v1856 = vtanh.pop %v1849
    %v1857 = vmul.f32 %v1855, %v1765
    %1859 = vrot.lane.b32.xlu0 %v1856, 64
    %v1860 = vpop.permute.xlu0 %1859
    %v1862 = vmul.f32 %v1855, %v1860
    %1864 = vrot.lane.b32.xlu0 %v1862, 32
    %v1865 = vpop.permute.xlu0 %1864
    %v1867 = vadd.f32 %v1857, %v1865
    %v1868 = vtanh.pop %v1867
    %1870 = vrot.lane.b32.xlu0 %v1868, 64
    %v1871 = vpop.permute.xlu0 %1870
    %v1873 = vmul.f32 %v1855, %v1871
    %1875 = vrot.lane.b32.xlu0 %v1873, 32
    %v1876 = vpop.permute.xlu0 %1875
    %1878 = vst.msk [vmem:[%s11 + $0x20] sm:$0xff] %vm266, %v1876
    %v1879 = vsel %vm266, %v1876, 0
    %1881 = vmatprep.subr.mxu0 0.0
    %1882 = vmatpush1.msra.mxu0 %v1231
    %1883 = vmatprep.subr.mxu0 0.0
    %1884 = vmatpush1.msra.mxu0 %v1232
    %1885 = vmatprep.subr.mxu0 0.0
    %1886 = vmatpush1.msra.mxu0 %v1233
    %1887 = vmatprep.subr.mxu0 0.0
    %1888 = vmatpush1.msra.mxu0 %v1234
    %1889 = vmatprep.subr.mxu0 0.0
    %1890 = vmatpush1.msra.mxu0 0.0
    %1891 = vmatprep.subr.mxu0 0.0
    %1892 = vmatpush1.msra.mxu0 0.0
    %1893 = vmatprep.subr.mxu0 0.0
    %1894 = vmatpush1.msra.mxu0 0.0
    %1895 = vmatprep.subr.mxu0 0.0
    %1896 = vmatpush1.msra.mxu0 0.0
    %1897 = vmatprep.subr.mxu0 0.0
    %1898 = vmatpush1.msra.mxu0 0.0
    %1899 = vmatprep.subr.mxu0 0.0
    %1900 = vmatpush1.msra.mxu0 0.0
    %1901 = vmatprep.subr.mxu0 0.0
    %1902 = vmatpush1.msra.mxu0 0.0
    %1903 = vmatprep.subr.mxu0 0.0
    %1904 = vmatpush1.msra.mxu0 0.0
    %1905 = vmatprep.subr.mxu0 0.0
    %1906 = vmatpush1.msra.mxu0 0.0
    %1907 = vmatprep.subr.mxu0 0.0
    %1908 = vmatpush1.msra.mxu0 0.0
    %1909 = vmatprep.subr.mxu0 0.0
    %1910 = vmatpush1.msra.mxu0 0.0
    %1911 = vmatprep.subr.mxu0 0.0
    %1912 = vmatpush1.msra.mxu0 0.0
    %1913 = vmatprep.subr.mxu0 0.0
    %1914 = vmatpush1.msra.mxu0 0.0
    %1915 = vmatprep.subr.mxu0 0.0
    %1916 = vmatpush1.msra.mxu0 0.0
    %1917 = vmatprep.subr.mxu0 0.0
    %1918 = vmatpush1.msra.mxu0 0.0
    %1919 = vmatprep.subr.mxu0 0.0
    %1920 = vmatpush1.msra.mxu0 0.0
    %1921 = vmatprep.subr.mxu0 0.0
    %1922 = vmatpush1.msra.mxu0 0.0
    %1923 = vmatprep.subr.mxu0 0.0
    %1924 = vmatpush1.msra.mxu0 0.0
    %1925 = vmatprep.subr.mxu0 0.0
    %1926 = vmatpush1.msra.mxu0 0.0
    %1927 = vmatprep.subr.mxu0 0.0
    %1928 = vmatpush1.msra.mxu0 0.0
    %1929 = vmatprep.subr.mxu0 0.0
    %1930 = vmatpush1.msra.mxu0 0.0
    %1931 = vmatprep.subr.mxu0 0.0
    %1932 = vmatpush1.msra.mxu0 0.0
    %1933 = vmatprep.subr.mxu0 0.0
    %1934 = vmatpush1.msra.mxu0 0.0
    %1935 = vmatprep.subr.mxu0 0.0
    %1936 = vmatpush1.msra.mxu0 0.0
    %1937 = vmatprep.subr.mxu0 0.0
    %1938 = vmatpush1.msra.mxu0 0.0
    %1939 = vmatprep.subr.mxu0 0.0
    %1940 = vmatpush1.msra.mxu0 0.0
    %1941 = vmatprep.subr.mxu0 0.0
    %1942 = vmatpush1.msra.mxu0 0.0
    %1943 = vmatprep.subr.mxu0 0.0
    %1944 = vmatpush1.msra.mxu0 0.0
    %1945 = vmatprep.mubr.f32.mxu0 0.0
    %1946 = vmatmul.mubr.f32.gmra.mrb[0].mxu0 %v1879
    %v1947 = vpop.f32.mrb[0].mxu0
    %v1948 = vadd.f32 0.0, %v1947
    %v1949 = vpop.f32.mrb[0].mxu0
    %1950 = vdwg.mxu0
    %v1951 = vadd.f32 %v1358, %v1948
    %v1952 = vxor.u32 %v1951, 2147483648
    %v1953 = vmul.f32 %v1952, 1.442695
    %v1954 = vpow.pop %v1953
    %v1955 = vadd.f32 %v1954, 1.0
    %v1956 = vrcp.pop %v1955
    %v1957 = vmul.f32 1.0, %v1956
    %v1958 = vtanh.pop %v1951
    %v1959 = vmul.f32 %v1957, %v1867
    %1961 = vrot.lane.b32.xlu0 %v1958, 64
    %v1962 = vpop.permute.xlu0 %1961
    %v1964 = vmul.f32 %v1957, %v1962
    %1966 = vrot.lane.b32.xlu0 %v1964, 32
    %v1967 = vpop.permute.xlu0 %1966
    %v1969 = vadd.f32 %v1959, %v1967
    %v1970 = vtanh.pop %v1969
    %1972 = vrot.lane.b32.xlu0 %v1970, 64
    %v1973 = vpop.permute.xlu0 %1972
    %v1975 = vmul.f32 %v1957, %v1973
    %1977 = vrot.lane.b32.xlu0 %v1975, 32
    %v1978 = vpop.permute.xlu0 %1977
    %1980 = vst.msk [vmem:[%s11 + $0x28] sm:$0xff] %vm266, %v1978
    %v1981 = vsel %vm266, %v1978, 0
    %1983 = vmatprep.subr.mxu0 0.0
    %1984 = vmatpush1.msra.mxu0 %v1231
    %1985 = vmatprep.subr.mxu0 0.0
    %1986 = vmatpush1.msra.mxu0 %v1232
    %1987 = vmatprep.subr.mxu0 0.0
    %1988 = vmatpush1.msra.mxu0 %v1233
    %1989 = vmatprep.subr.mxu0 0.0
    %1990 = vmatpush1.msra.mxu0 %v1234
    %1991 = vmatprep.subr.mxu0 0.0
    %1992 = vmatpush1.msra.mxu0 0.0
    %1993 = vmatprep.subr.mxu0 0.0
    %1994 = vmatpush1.msra.mxu0 0.0
    %1995 = vmatprep.subr.mxu0 0.0
    %1996 = vmatpush1.msra.mxu0 0.0
    %1997 = vmatprep.subr.mxu0 0.0
    %1998 = vmatpush1.msra.mxu0 0.0
    %1999 = vmatprep.subr.mxu0 0.0
    %2000 = vmatpush1.msra.mxu0 0.0
    %2001 = vmatprep.subr.mxu0 0.0
    %2002 = vmatpush1.msra.mxu0 0.0
    %2003 = vmatprep.subr.mxu0 0.0
    %2004 = vmatpush1.msra.mxu0 0.0
    %2005 = vmatprep.subr.mxu0 0.0
    %2006 = vmatpush1.msra.mxu0 0.0
    %2007 = vmatprep.subr.mxu0 0.0
    %2008 = vmatpush1.msra.mxu0 0.0
    %2009 = vmatprep.subr.mxu0 0.0
    %2010 = vmatpush1.msra.mxu0 0.0
    %2011 = vmatprep.subr.mxu0 0.0
    %2012 = vmatpush1.msra.mxu0 0.0
    %2013 = vmatprep.subr.mxu0 0.0
    %2014 = vmatpush1.msra.mxu0 0.0
    %2015 = vmatprep.subr.mxu0 0.0
    %2016 = vmatpush1.msra.mxu0 0.0
    %2017 = vmatprep.subr.mxu0 0.0
    %2018 = vmatpush1.msra.mxu0 0.0
    %2019 = vmatprep.subr.mxu0 0.0
    %2020 = vmatpush1.msra.mxu0 0.0
    %2021 = vmatprep.subr.mxu0 0.0
    %2022 = vmatpush1.msra.mxu0 0.0
    %2023 = vmatprep.subr.mxu0 0.0
    %2024 = vmatpush1.msra.mxu0 0.0
    %2025 = vmatprep.subr.mxu0 0.0
    %2026 = vmatpush1.msra.mxu0 0.0
    %2027 = vmatprep.subr.mxu0 0.0
    %2028 = vmatpush1.msra.mxu0 0.0
    %2029 = vmatprep.subr.mxu0 0.0
    %2030 = vmatpush1.msra.mxu0 0.0
    %2031 = vmatprep.subr.mxu0 0.0
    %2032 = vmatpush1.msra.mxu0 0.0
    %2033 = vmatprep.subr.mxu0 0.0
    %2034 = vmatpush1.msra.mxu0 0.0
    %2035 = vmatprep.subr.mxu0 0.0
    %2036 = vmatpush1.msra.mxu0 0.0
    %2037 = vmatprep.subr.mxu0 0.0
    %2038 = vmatpush1.msra.mxu0 0.0
    %2039 = vmatprep.subr.mxu0 0.0
    %2040 = vmatpush1.msra.mxu0 0.0
    %2041 = vmatprep.subr.mxu0 0.0
    %2042 = vmatpush1.msra.mxu0 0.0
    %2043 = vmatprep.subr.mxu0 0.0
    %2044 = vmatpush1.msra.mxu0 0.0
    %2045 = vmatprep.subr.mxu0 0.0
    %2046 = vmatpush1.msra.mxu0 0.0
    %2047 = vmatprep.mubr.f32.mxu0 0.0
    %2048 = vmatmul.mubr.f32.gmra.mrb[0].mxu0 %v1981
    %v2049 = vpop.f32.mrb[0].mxu0
    %v2050 = vadd.f32 0.0, %v2049
    %v2051 = vpop.f32.mrb[0].mxu0
    %2052 = vdwg.mxu0
    %v2053 = vadd.f32 %v1363, %v2050
    %v2054 = vxor.u32 %v2053, 2147483648
    %v2055 = vmul.f32 %v2054, 1.442695
    %v2056 = vpow.pop %v2055
    %v2057 = vadd.f32 %v2056, 1.0
    %v2058 = vrcp.pop %v2057
    %v2059 = vmul.f32 1.0, %v2058
    %v2060 = vtanh.pop %v2053
    %v2061 = vmul.f32 %v2059, %v1969
    %2063 = vrot.lane.b32.xlu0 %v2060, 64
    %v2064 = vpop.permute.xlu0 %2063
    %v2066 = vmul.f32 %v2059, %v2064
    %2068 = vrot.lane.b32.xlu0 %v2066, 32
    %v2069 = vpop.permute.xlu0 %2068
    %v2071 = vadd.f32 %v2061, %v2069
    %v2072 = vtanh.pop %v2071
    %2074 = vrot.lane.b32.xlu0 %v2072, 64
    %v2075 = vpop.permute.xlu0 %2074
    %v2077 = vmul.f32 %v2059, %v2075
    %2079 = vrot.lane.b32.xlu0 %v2077, 32
    %v2080 = vpop.permute.xlu0 %2079
    %2082 = vst.msk [vmem:[%s11 + $0x30] sm:$0xff] %vm266, %v2080
    %v2083 = vsel %vm266, %v2080, 0
    %2085 = vmatprep.subr.mxu0 0.0
    %2086 = vmatpush1.msra.mxu0 %v1231
    %2087 = vmatprep.subr.mxu0 0.0
    %2088 = vmatpush1.msra.mxu0 %v1232
    %2089 = vmatprep.subr.mxu0 0.0
    %2090 = vmatpush1.msra.mxu0 %v1233
    %2091 = vmatprep.subr.mxu0 0.0
    %2092 = vmatpush1.msra.mxu0 %v1234
    %2093 = vmatprep.subr.mxu0 0.0
    %2094 = vmatpush1.msra.mxu0 0.0
    %2095 = vmatprep.subr.mxu0 0.0
    %2096 = vmatpush1.msra.mxu0 0.0
    %2097 = vmatprep.subr.mxu0 0.0
    %2098 = vmatpush1.msra.mxu0 0.0
    %2099 = vmatprep.subr.mxu0 0.0
    %2100 = vmatpush1.msra.mxu0 0.0
    %2101 = vmatprep.subr.mxu0 0.0
    %2102 = vmatpush1.msra.mxu0 0.0
    %2103 = vmatprep.subr.mxu0 0.0
    %2104 = vmatpush1.msra.mxu0 0.0
    %2105 = vmatprep.subr.mxu0 0.0
    %2106 = vmatpush1.msra.mxu0 0.0
    %2107 = vmatprep.subr.mxu0 0.0
    %2108 = vmatpush1.msra.mxu0 0.0
    %2109 = vmatprep.subr.mxu0 0.0
    %2110 = vmatpush1.msra.mxu0 0.0
    %2111 = vmatprep.subr.mxu0 0.0
    %2112 = vmatpush1.msra.mxu0 0.0
    %2113 = vmatprep.subr.mxu0 0.0
    %2114 = vmatpush1.msra.mxu0 0.0
    %2115 = vmatprep.subr.mxu0 0.0
    %2116 = vmatpush1.msra.mxu0 0.0
    %2117 = vmatprep.subr.mxu0 0.0
    %2118 = vmatpush1.msra.mxu0 0.0
    %2119 = vmatprep.subr.mxu0 0.0
    %2120 = vmatpush1.msra.mxu0 0.0
    %2121 = vmatprep.subr.mxu0 0.0
    %2122 = vmatpush1.msra.mxu0 0.0
    %2123 = vmatprep.subr.mxu0 0.0
    %2124 = vmatpush1.msra.mxu0 0.0
    %2125 = vmatprep.subr.mxu0 0.0
    %2126 = vmatpush1.msra.mxu0 0.0
    %2127 = vmatprep.subr.mxu0 0.0
    %2128 = vmatpush1.msra.mxu0 0.0
    %2129 = vmatprep.subr.mxu0 0.0
    %2130 = vmatpush1.msra.mxu0 0.0
    %2131 = vmatprep.subr.mxu0 0.0
    %2132 = vmatpush1.msra.mxu0 0.0
    %2133 = vmatprep.subr.mxu0 0.0
    %2134 = vmatpush1.msra.mxu0 0.0
    %2135 = vmatprep.subr.mxu0 0.0
    %2136 = vmatpush1.msra.mxu0 0.0
    %2137 = vmatprep.subr.mxu0 0.0
    %2138 = vmatpush1.msra.mxu0 0.0
    %2139 = vmatprep.subr.mxu0 0.0
    %2140 = vmatpush1.msra.mxu0 0.0
    %2141 = vmatprep.subr.mxu0 0.0
    %2142 = vmatpush1.msra.mxu0 0.0
    %2143 = vmatprep.subr.mxu0 0.0
    %2144 = vmatpush1.msra.mxu0 0.0
    %2145 = vmatprep.subr.mxu0 0.0
    %2146 = vmatpush1.msra.mxu0 0.0
    %2147 = vmatprep.subr.mxu0 0.0
    %2148 = vmatpush1.msra.mxu0 0.0
    %2149 = vmatprep.mubr.f32.mxu0 0.0
    %2150 = vmatmul.mubr.f32.gmra.mrb[0].mxu0 %v2083
    %v2151 = vpop.f32.mrb[0].mxu0
    %v2152 = vadd.f32 0.0, %v2151
    %v2153 = vpop.f32.mrb[0].mxu0
    %2154 = vdwg.mxu0
    %v2155 = vadd.f32 %v1368, %v2152
    %v2156 = vxor.u32 %v2155, 2147483648
    %v2157 = vmul.f32 %v2156, 1.442695
    %v2158 = vpow.pop %v2157
    %v2159 = vadd.f32 %v2158, 1.0
    %v2160 = vrcp.pop %v2159
    %v2161 = vmul.f32 1.0, %v2160
    %v2162 = vtanh.pop %v2155
    %v2163 = vmul.f32 %v2161, %v2071
    %2165 = vrot.lane.b32.xlu0 %v2162, 64
    %v2166 = vpop.permute.xlu0 %2165
    %v2168 = vmul.f32 %v2161, %v2166
    %2170 = vrot.lane.b32.xlu0 %v2168, 32
    %v2171 = vpop.permute.xlu0 %2170
    %v2173 = vadd.f32 %v2163, %v2171
    %v2174 = vtanh.pop %v2173
    %2176 = vrot.lane.b32.xlu0 %v2174, 64
    %v2177 = vpop.permute.xlu0 %2176
    %v2179 = vmul.f32 %v2161, %v2177
    %2181 = vrot.lane.b32.xlu0 %v2179, 32
    %v2182 = vpop.permute.xlu0 %2181
    %2184 = vst.msk [vmem:[%s11 + $0x38] sm:$0xff] %vm266, %v2182
    %s2185 = scalar_lea.vmem [#allocation6], 8
    %2186 = vst.msk [vmem:[%s2185] sm:$0xff] %vm266, %v2182
    %2188 = vrot.lane.b32.xlu0 %v2173, 96
    %v2189 = vpop.permute.xlu0 %2188
    %s2191 = scalar_lea.vmem [#allocation8], 8
    %2192 = vst.msk [vmem:[%s2191] sm:$0xff] %vm266, %v2189
    %v2193 = vld [vmem:[%s11] sm:$0xff]
    %v2194 = vld [vmem:[%s11 + $0x8] sm:$0xff]
    %v2195 = vld [vmem:[%s11 + $0x10] sm:$0xff]
    %v2196 = vld [vmem:[%s11 + $0x18] sm:$0xff]
    %v2197 = vld [vmem:[%s11 + $0x20] sm:$0xff]
    %v2198 = vld [vmem:[%s11 + $0x28] sm:$0xff]
    %v2199 = vld [vmem:[%s11 + $0x30] sm:$0xff]
    %v2200 = vld [vmem:[%s11 + $0x38] sm:$0xff]
    %v2201 = vld [vmem:[#allocation2] sm:$0xff]
    %v2202 = vld [vmem:[#allocation2 + $0x8] sm:$0xff]
    %v2203 = vld [vmem:[#allocation2 + $0x10] sm:$0xff]
    %v2204 = vld [vmem:[#allocation2 + $0x18] sm:$0xff]
    %v2205 = vld [vmem:[%s9] sm:$0x1]
    %v2207 = vlaneseq
    %v2208 = vshrl.u32 %v2207, 7
    %v2209 = vsub.s32 0, %v2208
    %v2210 = vrot.slane %v2205, %v2209
    %v2213 = vsel %vm266, %v2193, 0
    %v2216 = vsel %vm266, %v2194, 0
    %v2219 = vsel %vm266, %v2195, 0
    %v2222 = vsel %vm266, %v2196, 0
    %v2225 = vsel %vm266, %v2197, 0
    %v2228 = vsel %vm266, %v2198, 0
    %v2231 = vsel %vm266, %v2199, 0
    %v2234 = vsel %vm266, %v2200, 0
    %2236 = vmatprep.subr.mxu0 0.0
    %2237 = vmatpush1.msra.mxu0 %v2201
    %2238 = vmatprep.subr.mxu0 0.0
    %2239 = vmatpush1.msra.mxu0 %v2202
    %2240 = vmatprep.subr.mxu0 0.0
    %2241 = vmatpush1.msra.mxu0 %v2203
    %2242 = vmatprep.subr.mxu0 0.0
    %2243 = vmatpush1.msra.mxu0 %v2204
    %2244 = vmatprep.subr.mxu0 0.0
    %2245 = vmatpush1.msra.mxu0 0.0
    %2246 = vmatprep.subr.mxu0 0.0
    %2247 = vmatpush1.msra.mxu0 0.0
    %2248 = vmatprep.subr.mxu0 0.0
    %2249 = vmatpush1.msra.mxu0 0.0
    %2250 = vmatprep.subr.mxu0 0.0
    %2251 = vmatpush1.msra.mxu0 0.0
    %2252 = vmatprep.subr.mxu0 0.0
    %2253 = vmatpush1.msra.mxu0 0.0
    %2254 = vmatprep.subr.mxu0 0.0
    %2255 = vmatpush1.msra.mxu0 0.0
    %2256 = vmatprep.subr.mxu0 0.0
    %2257 = vmatpush1.msra.mxu0 0.0
    %2258 = vmatprep.subr.mxu0 0.0
    %2259 = vmatpush1.msra.mxu0 0.0
    %2260 = vmatprep.subr.mxu0 0.0
    %2261 = vmatpush1.msra.mxu0 0.0
    %2262 = vmatprep.subr.mxu0 0.0
    %2263 = vmatpush1.msra.mxu0 0.0
    %2264 = vmatprep.subr.mxu0 0.0
    %2265 = vmatpush1.msra.mxu0 0.0
    %2266 = vmatprep.subr.mxu0 0.0
    %2267 = vmatpush1.msra.mxu0 0.0
    %2268 = vmatprep.subr.mxu0 0.0
    %2269 = vmatpush1.msra.mxu0 0.0
    %2270 = vmatprep.subr.mxu0 0.0
    %2271 = vmatpush1.msra.mxu0 0.0
    %2272 = vmatprep.subr.mxu0 0.0
    %2273 = vmatpush1.msra.mxu0 0.0
    %2274 = vmatprep.subr.mxu0 0.0
    %2275 = vmatpush1.msra.mxu0 0.0
    %2276 = vmatprep.subr.mxu0 0.0
    %2277 = vmatpush1.msra.mxu0 0.0
    %2278 = vmatprep.subr.mxu0 0.0
    %2279 = vmatpush1.msra.mxu0 0.0
    %2280 = vmatprep.subr.mxu0 0.0
    %2281 = vmatpush1.msra.mxu0 0.0
    %2282 = vmatprep.subr.mxu0 0.0
    %2283 = vmatpush1.msra.mxu0 0.0
    %2284 = vmatprep.subr.mxu0 0.0
    %2285 = vmatpush1.msra.mxu0 0.0
    %2286 = vmatprep.subr.mxu0 0.0
    %2287 = vmatpush1.msra.mxu0 0.0
    %2288 = vmatprep.subr.mxu0 0.0
    %2289 = vmatpush1.msra.mxu0 0.0
    %2290 = vmatprep.subr.mxu0 0.0
    %2291 = vmatpush1.msra.mxu0 0.0
    %2292 = vmatprep.subr.mxu0 0.0
    %2293 = vmatpush1.msra.mxu0 0.0
    %2294 = vmatprep.subr.mxu0 0.0
    %2295 = vmatpush1.msra.mxu0 0.0
    %2296 = vmatprep.subr.mxu0 0.0
    %2297 = vmatpush1.msra.mxu0 0.0
    %2298 = vmatprep.subr.mxu0 0.0
    %2299 = vmatpush1.msra.mxu0 0.0
    %2300 = vmatprep.mubr.f32.mxu0 0.0
    %2301 = vmatmul.mubr.f32.gmra.mrb[0].mxu0 %v2213
    %v2302 = vpop.f32.mrb[0].mxu0
    %v2303 = vadd.f32 %v2210, %v2302
    %v2304 = vpop.f32.mrb[0].mxu0
    %2305 = vmatprep.mubr.f32.mxu0 0.0
    %2306 = vmatmul.mubr.f32.gmra.mrb[0].mxu0 %v2216
    %v2307 = vpop.f32.mrb[0].mxu0
    %v2308 = vadd.f32 %v2210, %v2307
    %v2309 = vpop.f32.mrb[0].mxu0
    %2310 = vmatprep.mubr.f32.mxu0 0.0
    %2311 = vmatmul.mubr.f32.gmra.mrb[0].mxu0 %v2219
    %v2312 = vpop.f32.mrb[0].mxu0
    %v2313 = vadd.f32 %v2210, %v2312
    %v2314 = vpop.f32.mrb[0].mxu0
    %2315 = vmatprep.mubr.f32.mxu0 0.0
    %2316 = vmatmul.mubr.f32.gmra.mrb[0].mxu0 %v2222
    %v2317 = vpop.f32.mrb[0].mxu0
    %v2318 = vadd.f32 %v2210, %v2317
    %v2319 = vpop.f32.mrb[0].mxu0
    %2320 = vmatprep.mubr.f32.mxu0 0.0
    %2321 = vmatmul.mubr.f32.gmra.mrb[0].mxu0 %v2225
    %v2322 = vpop.f32.mrb[0].mxu0
    %v2323 = vadd.f32 %v2210, %v2322
    %v2324 = vpop.f32.mrb[0].mxu0
    %2325 = vmatprep.mubr.f32.mxu0 0.0
    %2326 = vmatmul.mubr.f32.gmra.mrb[0].mxu0 %v2228
    %v2327 = vpop.f32.mrb[0].mxu0
    %v2328 = vadd.f32 %v2210, %v2327
    %v2329 = vpop.f32.mrb[0].mxu0
    %2330 = vmatprep.mubr.f32.mxu0 0.0
    %2331 = vmatmul.mubr.f32.gmra.mrb[0].mxu0 %v2231
    %v2332 = vpop.f32.mrb[0].mxu0
    %v2333 = vadd.f32 %v2210, %v2332
    %v2334 = vpop.f32.mrb[0].mxu0
    %2335 = vmatprep.mubr.f32.mxu0 0.0
    %2336 = vmatmul.mubr.f32.gmra.mrb[0].mxu0 %v2234
    %v2337 = vpop.f32.mrb[0].mxu0
    %v2338 = vadd.f32 %v2210, %v2337
    %v2339 = vpop.f32.mrb[0].mxu0
    %2340 = vdwg.mxu0
    %2341 = vst.msk [vmem:[#allocation5] sm:$0xff] %vm121, %v2303
    %2342 = vst.msk [vmem:[#allocation5 + $0x8] sm:$0xff] %vm121, %v2308
    %2343 = vst.msk [vmem:[#allocation5 + $0x10] sm:$0xff] %vm121, %v2313
    %2344 = vst.msk [vmem:[#allocation5 + $0x18] sm:$0xff] %vm121, %v2318
    %2345 = vst.msk [vmem:[#allocation5 + $0x20] sm:$0xff] %vm121, %v2323
    %2346 = vst.msk [vmem:[#allocation5 + $0x28] sm:$0xff] %vm121, %v2328
    %2347 = vst.msk [vmem:[#allocation5 + $0x30] sm:$0xff] %vm121, %v2333
    %2348 = vst.msk [vmem:[#allocation5 + $0x38] sm:$0xff] %vm121, %v2338
    // Predicated region
    $region46: #{tpu_custom_call.1} parent=1 // pred_check
      _
    $region47: #{tpu_custom_call.1} parent=1 // pred_check_branch
      %2350 = sbr.rel (0) target = $region49
    $region48: #{tpu_custom_call.1} parent=1 // pred_region
      %s2352 = ssub.s32 1024, 1024
      %2353 = vsyncadd [#allocation4], %s2352
      %s2354 = sshll.u32 [#allocation5], 4
      %s2355 = int_to_ptr.vmem [resolvable:$true] %s2354
      %2360 = dma.vmem_to_hbm [thread:$0]  %s2355, 1024, %s10, [#allocation4], 128, 128, 8
    $region49: #{tpu_custom_call.1} parent=1 // pred_fallthru
      _
    // Predicated region
    $region50: #{tpu_custom_call.1} parent=1 // pred_check
      _
    $region51: #{tpu_custom_call.1} parent=1 // pred_check_branch
      %2362 = sbr.rel (0) target = $region53
    $region52: #{tpu_custom_call.1} parent=1 // pred_region
      _
    $region53: #{tpu_custom_call.1} parent=1 // pred_fallthru
      _
    // Predicated region
    $region54: #{tpu_custom_call.1} parent=1 // pred_check
      _
    $region55: #{tpu_custom_call.1} parent=1 // pred_check_branch
      %2364 = sbr.rel (0) target = $region57
    $region56: #{tpu_custom_call.1} parent=1 // pred_region
      %s2366 = ssub.s32 256, 256
      %2367 = vsyncadd [#allocation7], %s2366
      %s2368 = sshll.u32 [#allocation6], 4
      %s2369 = int_to_ptr.vmem [resolvable:$true] %s2368
      %2374 = dma.vmem_to_hbm [thread:$0]  %s2369, 256, %s12, [#allocation7], 128, 128, 8
    $region57: #{tpu_custom_call.1} parent=1 // pred_fallthru
      _
    // Predicated region
    $region58: #{tpu_custom_call.1} parent=1 // pred_check
      _
    $region59: #{tpu_custom_call.1} parent=1 // pred_check_branch
      %2376 = sbr.rel (0) target = $region61
    $region60: #{tpu_custom_call.1} parent=1 // pred_region
      %s2378 = ssub.s32 256, 256
      %2379 = vsyncadd [#allocation7], %s2378
      %s2380 = sshll.u32 [#allocation8], 4
      %s2381 = int_to_ptr.vmem [resolvable:$true] %s2380
      %2386 = dma.vmem_to_hbm [thread:$0]  %s2381, 256, %s13, [#allocation7], 128, 128, 8
    $region61: #{tpu_custom_call.1} parent=1 // pred_fallthru
      _
    // Predicated region
    $region62: #{tpu_custom_call.1} parent=1 // pred_check
      _
    $region63: #{tpu_custom_call.1} parent=1 // pred_check_branch
      %2388 = sbr.rel (0) target = $region65
    $region64: #{tpu_custom_call.1} parent=1 // pred_region
      %2389 = dma.done [#allocation4], 1024
    $region65: #{tpu_custom_call.1} parent=1 // pred_fallthru
      _
    // Predicated region
    $region66: #{tpu_custom_call.1} parent=1 // pred_check
      _
    $region67: #{tpu_custom_call.1} parent=1 // pred_check_branch
      %2391 = sbr.rel (0) target = $region69
    $region68: #{tpu_custom_call.1} parent=1 // pred_region
      _
    $region69: #{tpu_custom_call.1} parent=1 // pred_fallthru
      _
    // Predicated region
    $region70: #{tpu_custom_call.1} parent=1 // pred_check
      _
    $region71: #{tpu_custom_call.1} parent=1 // pred_check_branch
      %2393 = sbr.rel (0) target = $region73
    $region72: #{tpu_custom_call.1} parent=1 // pred_region
      %2394 = dma.done [#allocation7], 256
    $region73: #{tpu_custom_call.1} parent=1 // pred_fallthru
      _
    // Predicated region
    $region74: #{tpu_custom_call.1} parent=1 // pred_check
      _
    $region75: #{tpu_custom_call.1} parent=1 // pred_check_branch
      %2396 = sbr.rel (0) target = $region77
    $region76: #{tpu_custom_call.1} parent=1 // pred_region
      %2397 = dma.done [#allocation7], 256
    $region77: #{tpu_custom_call.1} parent=1 // pred_fallthru
      _
    %2398 = vsyncpa [#allocation3], 1
    %2399 = vsyncpa [#allocation4], 1
    %2400 = vsyncpa [#allocation7], 1

</llo_original>
